<compile_context>
chip_gen: v5e
topology: v5e:2x2
jax: 0.10.0
libtpu: 0.0.40
codegen_flags: <defaults>
</compile_context>

<pallas_src>
import functools

import jax
import jax.numpy as jnp
import numpy as np
from jax.experimental import pallas as pl
from jax.experimental.pallas import tpu as pltpu


def _loss_kernel(ki_ref, ci_ref, kp_ref, cp_ref, mu_ref, lv_ref, out_ref,
                 *, beta, w, c):
    f32 = jnp.float32
    D, N, Bb = ki_ref.shape          # (3, 8, block_b)
    C = ci_ref.shape[0]              # 9

    # One (N, Bb) = (8, 128) vreg per feature plane: particle index on the
    # sublanes, batch block on the lanes.
    ki = [ki_ref[k] for k in range(D)]    # input kinematics, rows = input particle n
    kp = [kp_ref[k] for k in range(D)]    # pred  kinematics, rows = pred  particle m
    ci = [ci_ref[j] for j in range(C)]    # input class scores, rows = n
    cp = [cp_ref[j] for j in range(C)]    # pred  log-probs,    rows = m

    m_iota = jax.lax.broadcasted_iota(jnp.int32, (N, Bb), 0)   # sublane = particle idx

    # ---- squared distances, one row per input particle ----------------------
    # d_rows[n][m, b] = || x_n(b) - y_m(b) ||^2       (VPU only, exact f32)
    d_rows = []
    for n in range(N):
        d_n = None
        for k in range(D):
            diff = ki[k][n:n + 1, :] - kp[k]          # (1,Bb) sublane-bcast vs (N,Bb)
            sq = diff * diff
            d_n = sq if d_n is None else d_n + sq
        d_rows.append(d_n)                             # (N, Bb), rows = m

    # ---- Chamfer direction 2: min over input particles n (elementwise) ------
    dist2 = d_rows[0]
    for n in range(1, N):
        dist2 = jnp.minimum(dist2, d_rows[n])          # (N, Bb), rows = m
    idx2 = jnp.full((N, Bb), N, jnp.int32)             # first argmin_n (match jnp.argmin)
    for n in range(N):
        idx2 = jnp.minimum(idx2, jnp.where(d_rows[n] == dist2, n, N))

    chamfer = jnp.sum(dist2, axis=0, keepdims=True)    # (1, Bb)  sum over m
    cls_acc = jnp.zeros((N, Bb), f32)                  # weighted class cross-terms

    for n in range(N):
        d_n = d_rows[n]
        # Chamfer direction 1: min over pred particles m (sublane reduction)
        dist1_n = jnp.min(d_n, axis=0, keepdims=True)                  # (1, Bb)
        idx1_n = jnp.min(jnp.where(d_n == dist1_n, m_iota, N),
                         axis=0, keepdims=True)                        # first argmin_m
        chamfer = chamfer + dist1_n

        # M_n[m, b] = sum_c class_input[n, c, b] * class_pred[m, c, b]
        M_n = None
        for j in range(C):
            t = ci[j][n:n + 1, :] * cp[j]              # (1,Bb) bcast * (N,Bb)
            M_n = t if M_n is None else M_n + t
        # weight[m, b] = [m == idx1[n, b]] + [idx2[m, b] == n]
        w_n = (m_iota == idx1_n).astype(f32) + (idx2 == n).astype(f32)
        cls_acc = cls_acc + w_n * M_n

    class_loss = -jnp.sum(cls_acc, axis=0, keepdims=True)              # (1, Bb)

    # ---- KL divergence (batch-vectorized, one reduction) ---------------------
    mu = mu_ref[...]                                    # (L, Bb)
    lv = lv_ref[...]
    kl = -0.5 * jnp.sum(1.0 + lv - mu * mu - jnp.exp(lv),
                        axis=0, keepdims=True)          # (1, Bb)

    # ---- Class-count (bincount) loss, batch-vectorized -----------------------
    max_i = ci[0]
    max_p = cp[0]
    for j in range(1, C):
        max_i = jnp.maximum(max_i, ci[j])
        max_p = jnp.maximum(max_p, cp[j])               # argmax(exp(cp)) == argmax(cp)
    arg_i = jnp.full((N, Bb), C, jnp.int32)
    arg_p = jnp.full((N, Bb), C, jnp.int32)
    for j in range(C):                                  # first argmax tie-break
        arg_i = jnp.minimum(arg_i, jnp.where(ci[j] == max_i, j, C))
        arg_p = jnp.minimum(arg_p, jnp.where(cp[j] == max_p, j, C))
    classnum = jnp.zeros((1, Bb), f32)
    for j in range(C):
        wj = 2.0 if j == 0 else (100.0 if j == C - 1 else 1.0)
        cnt_i = jnp.sum((arg_i == j).astype(f32), axis=0, keepdims=True)
        cnt_p = jnp.sum((arg_p == j).astype(f32), axis=0, keepdims=True)
        classnum = classnum + wj * jnp.abs(cnt_p - cnt_i)

    total = (1.0 - beta) * (chamfer + w * class_loss + c * classnum) + beta * kl
    out_ref[...] = total.astype(out_ref.dtype)          # lane-dense (1, block_b) store


def loss_func_pallas(kine_input, class_input, kine_pred, class_pred, mu, log_var,
                     *, beta, w, c, block_b=128):
    B, N, D = kine_input.shape
    C = class_input.shape[2]
    L = mu.shape[1]
    assert block_b % 128 == 0, "block_b must keep the batch lane-dense"

    # Pad B up to a multiple of block_b instead of shrinking the block; pad
    # lanes compute finite garbage that is sliced off below.  B > block_b
    # automatically gives >= 2 grid steps, so v7x's two TensorCores both work.
    grid_b = pl.cdiv(B, block_b)
    B_pad = grid_b * block_b
    pad = B_pad - B

    def prep_feat(x):   # (B, N, F) -> (F, N, B_pad)   batch -> lanes
        x = x.astype(jnp.float32)
        if pad:
            x = jnp.pad(x, ((0, pad), (0, 0), (0, 0)))
        return jnp.transpose(x, (2, 1, 0))

    def prep_stat(x):   # (B, L) -> (L, B_pad)
        x = x.astype(jnp.float32)
        if pad:
            x = jnp.pad(x, ((0, pad), (0, 0)))
        return jnp.transpose(x, (1, 0))

    ki = prep_feat(kine_input)
    ci = prep_feat(class_input)
    kp = prep_feat(kine_pred)
    cp = prep_feat(class_pred)
    mu_t = prep_stat(mu)
    lv_t = prep_stat(log_var)

    kernel = functools.partial(_loss_kernel, beta=float(beta), w=float(w),
                               c=float(c))

    out = pl.pallas_call(
        kernel,
        out_shape=jax.ShapeDtypeStruct((grid_b, block_b), jnp.float32),
        grid_spec=pltpu.PrefetchScalarGridSpec(
            num_scalar_prefetch=0,
            grid=(grid_b,),
            in_specs=[
                pl.BlockSpec((D, N, block_b), lambda g: (0, 0, g)),
                pl.BlockSpec((C, N, block_b), lambda g: (0, 0, g)),
                pl.BlockSpec((D, N, block_b), lambda g: (0, 0, g)),
                pl.BlockSpec((C, N, block_b), lambda g: (0, 0, g)),
                pl.BlockSpec((L, block_b), lambda g: (0, g)),
                pl.BlockSpec((L, block_b), lambda g: (0, g)),
            ],
            out_specs=pl.BlockSpec((1, block_b), lambda g: (g, 0)),
        ),
        compiler_params=pltpu.CompilerParams(dimension_semantics=("parallel",)),
    )(ki, ci, kp, cp, mu_t, lv_t)
    return out.reshape(B_pad)[:B]


def loss_func_ref(kine_input, class_input, kine_pred, class_pred, mu, log_var,
                  *, beta, w, c):
    """Plain-JAX reference mirroring the PyTorch module."""
    xx = jnp.sum(kine_input ** 2, axis=-1)[:, :, None]
    yy = jnp.sum(kine_pred ** 2, axis=-1)[:, None, :]
    G = jnp.einsum('bnd,bmd->bnm', kine_input, kine_pred,
                   precision=jax.lax.Precision.HIGHEST)
    d = xx + yy - 2.0 * G                               # (B, N, M) squared distances
    dist1 = jnp.min(d, axis=2); idx1 = jnp.argmin(d, axis=2)
    dist2 = jnp.min(d, axis=1); idx2 = jnp.argmin(d, axis=1)
    chamfer = dist1.sum(1) + dist2.sum(1)

    sorted_pred = jnp.take_along_axis(class_pred, idx1[:, :, None], axis=1)
    sorted_input = jnp.take_along_axis(class_input, idx2[:, :, None], axis=1)
    class_loss = -jnp.sum(sorted_pred * class_input + sorted_input * class_pred,
                          axis=(1, 2))

    kl = -0.5 * jnp.sum(1.0 + log_var - mu ** 2 - jnp.exp(log_var), axis=1)

    C = class_input.shape[2]
    lab_i = jnp.argmax(class_input, axis=2)
    lab_p = jnp.argmax(jnp.exp(class_pred), axis=2)
    cnt_i = jnp.sum(jax.nn.one_hot(lab_i, C), axis=1)
    cnt_p = jnp.sum(jax.nn.one_hot(lab_p, C), axis=1)
    diff = jnp.abs(cnt_p - cnt_i)
    classnum = 2.0 * diff[:, 0] + jnp.sum(diff[:, 1:-1], axis=1) + 100.0 * diff[:, -1]

    return (1.0 - beta) * (chamfer + w * class_loss + c * classnum) + beta * kl


if __name__ == "__main__":
    # Small shapes consistent with the module: B=2 events, N=8 particles,
    # D=3 kinematic features, C=9 particle classes, L=32 latent dims.
    B, N, D, C, L = 2, 8, 3, 9, 32
    beta, w, c = 0.1, 1.0, 0.01

    key = jax.random.PRNGKey(0)
    k1, k2, k3, k4, k5, k6 = jax.random.split(key, 6)

    kine_input = jax.random.normal(k1, (B, N, D), jnp.float32)
    kine_pred = jax.random.normal(k2, (B, N, D), jnp.float32)
    labels = jax.random.randint(k3, (B, N), 0, C)
    class_input = jax.nn.one_hot(labels, C, dtype=jnp.float32)            # one-hot truth
    class_pred = jax.nn.log_softmax(
        jax.random.normal(k4, (B, N, C), jnp.float32), axis=-1)           # log-probs
    mu = jax.random.normal(k5, (B, L), jnp.float32)
    log_var = 0.1 * jax.random.normal(k6, (B, L), jnp.float32)

    out = loss_func_pallas(kine_input, class_input, kine_pred, class_pred,
                           mu, log_var, beta=beta, w=w, c=c)
    out = jax.block_until_ready(out)

    ref = loss_func_ref(kine_input, class_input, kine_pred, class_pred,
                        mu, log_var, beta=beta, w=w, c=c)
    np.testing.assert_allclose(np.asarray(out), np.asarray(ref), rtol=1e-3, atol=1e-2)

    print("KERNEL_OK")
</pallas_src>

<mosaic_0001>
module attributes {stable_mosaic.version = 11 : i64} {
  func.func @_loss_kernel(%arg0: i32, %arg1: memref<3x8x128xf32, #tpu.memory_space<vmem>>, %arg2: memref<9x8x128xf32, #tpu.memory_space<vmem>>, %arg3: memref<3x8x128xf32, #tpu.memory_space<vmem>>, %arg4: memref<9x8x128xf32, #tpu.memory_space<vmem>>, %arg5: memref<32x128xf32, #tpu.memory_space<vmem>>, %arg6: memref<32x128xf32, #tpu.memory_space<vmem>>, %arg7: memref<1x128xf32, #tpu.memory_space<vmem>>) attributes {dimension_semantics = [#tpu.dimension_semantics<parallel>], iteration_bounds = array<i64: 1>, scalar_prefetch = 0 : i64, scratch_operands = 0 : i64, tpu.core_type = #tpu.core_type<tc>, window_params = [{transform_indices = @transform_0, window_bounds = array<i64: 3, 8, 128>}, {transform_indices = @transform_1, window_bounds = array<i64: 9, 8, 128>}, {transform_indices = @transform_2, window_bounds = array<i64: 3, 8, 128>}, {transform_indices = @transform_3, window_bounds = array<i64: 9, 8, 128>}, {transform_indices = @transform_4, window_bounds = array<i64: 32, 128>}, {transform_indices = @transform_5, window_bounds = array<i64: 32, 128>}, {transform_indices = @transform_6, window_bounds = array<i64: 1, 128>}]} {
    %c0 = arith.constant 0 : index
    %c0_0 = arith.constant 0 : index
    %c0_1 = arith.constant 0 : index
    %0 = vector.load %arg1[%c0, %c0_0, %c0_1] : memref<3x8x128xf32, #tpu.memory_space<vmem>>, vector<1x8x128xf32>
    %1 = vector.shape_cast %0 : vector<1x8x128xf32> to vector<8x128xf32>
    %c1 = arith.constant 1 : index
    %c0_2 = arith.constant 0 : index
    %c0_3 = arith.constant 0 : index
    %2 = vector.load %arg1[%c1, %c0_2, %c0_3] : memref<3x8x128xf32, #tpu.memory_space<vmem>>, vector<1x8x128xf32>
    %3 = vector.shape_cast %2 : vector<1x8x128xf32> to vector<8x128xf32>
    %c2 = arith.constant 2 : index
    %c0_4 = arith.constant 0 : index
    %c0_5 = arith.constant 0 : index
    %4 = vector.load %arg1[%c2, %c0_4, %c0_5] : memref<3x8x128xf32, #tpu.memory_space<vmem>>, vector<1x8x128xf32>
    %5 = vector.shape_cast %4 : vector<1x8x128xf32> to vector<8x128xf32>
    %c0_6 = arith.constant 0 : index
    %c0_7 = arith.constant 0 : index
    %c0_8 = arith.constant 0 : index
    %6 = vector.load %arg3[%c0_6, %c0_7, %c0_8] : memref<3x8x128xf32, #tpu.memory_space<vmem>>, vector<1x8x128xf32>
    %7 = vector.shape_cast %6 : vector<1x8x128xf32> to vector<8x128xf32>
    %c1_9 = arith.constant 1 : index
    %c0_10 = arith.constant 0 : index
    %c0_11 = arith.constant 0 : index
    %8 = vector.load %arg3[%c1_9, %c0_10, %c0_11] : memref<3x8x128xf32, #tpu.memory_space<vmem>>, vector<1x8x128xf32>
    %9 = vector.shape_cast %8 : vector<1x8x128xf32> to vector<8x128xf32>
    %c2_12 = arith.constant 2 : index
    %c0_13 = arith.constant 0 : index
    %c0_14 = arith.constant 0 : index
    %10 = vector.load %arg3[%c2_12, %c0_13, %c0_14] : memref<3x8x128xf32, #tpu.memory_space<vmem>>, vector<1x8x128xf32>
    %11 = vector.shape_cast %10 : vector<1x8x128xf32> to vector<8x128xf32>
    %c0_15 = arith.constant 0 : index
    %c0_16 = arith.constant 0 : index
    %c0_17 = arith.constant 0 : index
    %12 = vector.load %arg2[%c0_15, %c0_16, %c0_17] : memref<9x8x128xf32, #tpu.memory_space<vmem>>, vector<1x8x128xf32>
    %13 = vector.shape_cast %12 : vector<1x8x128xf32> to vector<8x128xf32>
    %c1_18 = arith.constant 1 : index
    %c0_19 = arith.constant 0 : index
    %c0_20 = arith.constant 0 : index
    %14 = vector.load %arg2[%c1_18, %c0_19, %c0_20] : memref<9x8x128xf32, #tpu.memory_space<vmem>>, vector<1x8x128xf32>
    %15 = vector.shape_cast %14 : vector<1x8x128xf32> to vector<8x128xf32>
    %c2_21 = arith.constant 2 : index
    %c0_22 = arith.constant 0 : index
    %c0_23 = arith.constant 0 : index
    %16 = vector.load %arg2[%c2_21, %c0_22, %c0_23] : memref<9x8x128xf32, #tpu.memory_space<vmem>>, vector<1x8x128xf32>
    %17 = vector.shape_cast %16 : vector<1x8x128xf32> to vector<8x128xf32>
    %c3 = arith.constant 3 : index
    %c0_24 = arith.constant 0 : index
    %c0_25 = arith.constant 0 : index
    %18 = vector.load %arg2[%c3, %c0_24, %c0_25] : memref<9x8x128xf32, #tpu.memory_space<vmem>>, vector<1x8x128xf32>
    %19 = vector.shape_cast %18 : vector<1x8x128xf32> to vector<8x128xf32>
    %c4 = arith.constant 4 : index
    %c0_26 = arith.constant 0 : index
    %c0_27 = arith.constant 0 : index
    %20 = vector.load %arg2[%c4, %c0_26, %c0_27] : memref<9x8x128xf32, #tpu.memory_space<vmem>>, vector<1x8x128xf32>
    %21 = vector.shape_cast %20 : vector<1x8x128xf32> to vector<8x128xf32>
    %c5 = arith.constant 5 : index
    %c0_28 = arith.constant 0 : index
    %c0_29 = arith.constant 0 : index
    %22 = vector.load %arg2[%c5, %c0_28, %c0_29] : memref<9x8x128xf32, #tpu.memory_space<vmem>>, vector<1x8x128xf32>
    %23 = vector.shape_cast %22 : vector<1x8x128xf32> to vector<8x128xf32>
    %c6 = arith.constant 6 : index
    %c0_30 = arith.constant 0 : index
    %c0_31 = arith.constant 0 : index
    %24 = vector.load %arg2[%c6, %c0_30, %c0_31] : memref<9x8x128xf32, #tpu.memory_space<vmem>>, vector<1x8x128xf32>
    %25 = vector.shape_cast %24 : vector<1x8x128xf32> to vector<8x128xf32>
    %c7 = arith.constant 7 : index
    %c0_32 = arith.constant 0 : index
    %c0_33 = arith.constant 0 : index
    %26 = vector.load %arg2[%c7, %c0_32, %c0_33] : memref<9x8x128xf32, #tpu.memory_space<vmem>>, vector<1x8x128xf32>
    %27 = vector.shape_cast %26 : vector<1x8x128xf32> to vector<8x128xf32>
    %c8 = arith.constant 8 : index
    %c0_34 = arith.constant 0 : index
    %c0_35 = arith.constant 0 : index
    %28 = vector.load %arg2[%c8, %c0_34, %c0_35] : memref<9x8x128xf32, #tpu.memory_space<vmem>>, vector<1x8x128xf32>
    %29 = vector.shape_cast %28 : vector<1x8x128xf32> to vector<8x128xf32>
    %c0_36 = arith.constant 0 : index
    %c0_37 = arith.constant 0 : index
    %c0_38 = arith.constant 0 : index
    %30 = vector.load %arg4[%c0_36, %c0_37, %c0_38] : memref<9x8x128xf32, #tpu.memory_space<vmem>>, vector<1x8x128xf32>
    %31 = vector.shape_cast %30 : vector<1x8x128xf32> to vector<8x128xf32>
    %c1_39 = arith.constant 1 : index
    %c0_40 = arith.constant 0 : index
    %c0_41 = arith.constant 0 : index
    %32 = vector.load %arg4[%c1_39, %c0_40, %c0_41] : memref<9x8x128xf32, #tpu.memory_space<vmem>>, vector<1x8x128xf32>
    %33 = vector.shape_cast %32 : vector<1x8x128xf32> to vector<8x128xf32>
    %c2_42 = arith.constant 2 : index
    %c0_43 = arith.constant 0 : index
    %c0_44 = arith.constant 0 : index
    %34 = vector.load %arg4[%c2_42, %c0_43, %c0_44] : memref<9x8x128xf32, #tpu.memory_space<vmem>>, vector<1x8x128xf32>
    %35 = vector.shape_cast %34 : vector<1x8x128xf32> to vector<8x128xf32>
    %c3_45 = arith.constant 3 : index
    %c0_46 = arith.constant 0 : index
    %c0_47 = arith.constant 0 : index
    %36 = vector.load %arg4[%c3_45, %c0_46, %c0_47] : memref<9x8x128xf32, #tpu.memory_space<vmem>>, vector<1x8x128xf32>
    %37 = vector.shape_cast %36 : vector<1x8x128xf32> to vector<8x128xf32>
    %c4_48 = arith.constant 4 : index
    %c0_49 = arith.constant 0 : index
    %c0_50 = arith.constant 0 : index
    %38 = vector.load %arg4[%c4_48, %c0_49, %c0_50] : memref<9x8x128xf32, #tpu.memory_space<vmem>>, vector<1x8x128xf32>
    %39 = vector.shape_cast %38 : vector<1x8x128xf32> to vector<8x128xf32>
    %c5_51 = arith.constant 5 : index
    %c0_52 = arith.constant 0 : index
    %c0_53 = arith.constant 0 : index
    %40 = vector.load %arg4[%c5_51, %c0_52, %c0_53] : memref<9x8x128xf32, #tpu.memory_space<vmem>>, vector<1x8x128xf32>
    %41 = vector.shape_cast %40 : vector<1x8x128xf32> to vector<8x128xf32>
    %c6_54 = arith.constant 6 : index
    %c0_55 = arith.constant 0 : index
    %c0_56 = arith.constant 0 : index
    %42 = vector.load %arg4[%c6_54, %c0_55, %c0_56] : memref<9x8x128xf32, #tpu.memory_space<vmem>>, vector<1x8x128xf32>
    %43 = vector.shape_cast %42 : vector<1x8x128xf32> to vector<8x128xf32>
    %c7_57 = arith.constant 7 : index
    %c0_58 = arith.constant 0 : index
    %c0_59 = arith.constant 0 : index
    %44 = vector.load %arg4[%c7_57, %c0_58, %c0_59] : memref<9x8x128xf32, #tpu.memory_space<vmem>>, vector<1x8x128xf32>
    %45 = vector.shape_cast %44 : vector<1x8x128xf32> to vector<8x128xf32>
    %c8_60 = arith.constant 8 : index
    %c0_61 = arith.constant 0 : index
    %c0_62 = arith.constant 0 : index
    %46 = vector.load %arg4[%c8_60, %c0_61, %c0_62] : memref<9x8x128xf32, #tpu.memory_space<vmem>>, vector<1x8x128xf32>
    %47 = vector.shape_cast %46 : vector<1x8x128xf32> to vector<8x128xf32>
    %48 = tpu.iota {dimensions = array<i32: 0>} : vector<8x128xi32>
    %49 = vector.extract_strided_slice %1 {offsets = [0, 0], sizes = [1, 128], strides = [1, 1]} : vector<8x128xf32> to vector<1x128xf32>
    %50 = vector.broadcast %49 : vector<1x128xf32> to vector<8x128xf32>
    %51 = arith.subf %50, %7 : vector<8x128xf32>
    %52 = arith.mulf %51, %51 : vector<8x128xf32>
    %53 = vector.extract_strided_slice %3 {offsets = [0, 0], sizes = [1, 128], strides = [1, 1]} : vector<8x128xf32> to vector<1x128xf32>
    %54 = vector.broadcast %53 : vector<1x128xf32> to vector<8x128xf32>
    %55 = arith.subf %54, %9 : vector<8x128xf32>
    %56 = arith.mulf %55, %55 : vector<8x128xf32>
    %57 = arith.addf %52, %56 : vector<8x128xf32>
    %58 = vector.extract_strided_slice %5 {offsets = [0, 0], sizes = [1, 128], strides = [1, 1]} : vector<8x128xf32> to vector<1x128xf32>
    %59 = vector.broadcast %58 : vector<1x128xf32> to vector<8x128xf32>
    %60 = arith.subf %59, %11 : vector<8x128xf32>
    %61 = arith.mulf %60, %60 : vector<8x128xf32>
    %62 = arith.addf %57, %61 : vector<8x128xf32>
    %63 = vector.extract_strided_slice %1 {offsets = [1, 0], sizes = [1, 128], strides = [1, 1]} : vector<8x128xf32> to vector<1x128xf32>
    %64 = vector.broadcast %63 : vector<1x128xf32> to vector<8x128xf32>
    %65 = arith.subf %64, %7 : vector<8x128xf32>
    %66 = arith.mulf %65, %65 : vector<8x128xf32>
    %67 = vector.extract_strided_slice %3 {offsets = [1, 0], sizes = [1, 128], strides = [1, 1]} : vector<8x128xf32> to vector<1x128xf32>
    %68 = vector.broadcast %67 : vector<1x128xf32> to vector<8x128xf32>
    %69 = arith.subf %68, %9 : vector<8x128xf32>
    %70 = arith.mulf %69, %69 : vector<8x128xf32>
    %71 = arith.addf %66, %70 : vector<8x128xf32>
    %72 = vector.extract_strided_slice %5 {offsets = [1, 0], sizes = [1, 128], strides = [1, 1]} : vector<8x128xf32> to vector<1x128xf32>
    %73 = vector.broadcast %72 : vector<1x128xf32> to vector<8x128xf32>
    %74 = arith.subf %73, %11 : vector<8x128xf32>
    %75 = arith.mulf %74, %74 : vector<8x128xf32>
    %76 = arith.addf %71, %75 : vector<8x128xf32>
    %77 = vector.extract_strided_slice %1 {offsets = [2, 0], sizes = [1, 128], strides = [1, 1]} : vector<8x128xf32> to vector<1x128xf32>
    %78 = vector.broadcast %77 : vector<1x128xf32> to vector<8x128xf32>
    %79 = arith.subf %78, %7 : vector<8x128xf32>
    %80 = arith.mulf %79, %79 : vector<8x128xf32>
    %81 = vector.extract_strided_slice %3 {offsets = [2, 0], sizes = [1, 128], strides = [1, 1]} : vector<8x128xf32> to vector<1x128xf32>
    %82 = vector.broadcast %81 : vector<1x128xf32> to vector<8x128xf32>
    %83 = arith.subf %82, %9 : vector<8x128xf32>
    %84 = arith.mulf %83, %83 : vector<8x128xf32>
    %85 = arith.addf %80, %84 : vector<8x128xf32>
    %86 = vector.extract_strided_slice %5 {offsets = [2, 0], sizes = [1, 128], strides = [1, 1]} : vector<8x128xf32> to vector<1x128xf32>
    %87 = vector.broadcast %86 : vector<1x128xf32> to vector<8x128xf32>
    %88 = arith.subf %87, %11 : vector<8x128xf32>
    %89 = arith.mulf %88, %88 : vector<8x128xf32>
    %90 = arith.addf %85, %89 : vector<8x128xf32>
    %91 = vector.extract_strided_slice %1 {offsets = [3, 0], sizes = [1, 128], strides = [1, 1]} : vector<8x128xf32> to vector<1x128xf32>
    %92 = vector.broadcast %91 : vector<1x128xf32> to vector<8x128xf32>
    %93 = arith.subf %92, %7 : vector<8x128xf32>
    %94 = arith.mulf %93, %93 : vector<8x128xf32>
    %95 = vector.extract_strided_slice %3 {offsets = [3, 0], sizes = [1, 128], strides = [1, 1]} : vector<8x128xf32> to vector<1x128xf32>
    %96 = vector.broadcast %95 : vector<1x128xf32> to vector<8x128xf32>
    %97 = arith.subf %96, %9 : vector<8x128xf32>
    %98 = arith.mulf %97, %97 : vector<8x128xf32>
    %99 = arith.addf %94, %98 : vector<8x128xf32>
    %100 = vector.extract_strided_slice %5 {offsets = [3, 0], sizes = [1, 128], strides = [1, 1]} : vector<8x128xf32> to vector<1x128xf32>
    %101 = vector.broadcast %100 : vector<1x128xf32> to vector<8x128xf32>
    %102 = arith.subf %101, %11 : vector<8x128xf32>
    %103 = arith.mulf %102, %102 : vector<8x128xf32>
    %104 = arith.addf %99, %103 : vector<8x128xf32>
    %105 = vector.extract_strided_slice %1 {offsets = [4, 0], sizes = [1, 128], strides = [1, 1]} : vector<8x128xf32> to vector<1x128xf32>
    %106 = vector.broadcast %105 : vector<1x128xf32> to vector<8x128xf32>
    %107 = arith.subf %106, %7 : vector<8x128xf32>
    %108 = arith.mulf %107, %107 : vector<8x128xf32>
    %109 = vector.extract_strided_slice %3 {offsets = [4, 0], sizes = [1, 128], strides = [1, 1]} : vector<8x128xf32> to vector<1x128xf32>
    %110 = vector.broadcast %109 : vector<1x128xf32> to vector<8x128xf32>
    %111 = arith.subf %110, %9 : vector<8x128xf32>
    %112 = arith.mulf %111, %111 : vector<8x128xf32>
    %113 = arith.addf %108, %112 : vector<8x128xf32>
    %114 = vector.extract_strided_slice %5 {offsets = [4, 0], sizes = [1, 128], strides = [1, 1]} : vector<8x128xf32> to vector<1x128xf32>
    %115 = vector.broadcast %114 : vector<1x128xf32> to vector<8x128xf32>
    %116 = arith.subf %115, %11 : vector<8x128xf32>
    %117 = arith.mulf %116, %116 : vector<8x128xf32>
    %118 = arith.addf %113, %117 : vector<8x128xf32>
    %119 = vector.extract_strided_slice %1 {offsets = [5, 0], sizes = [1, 128], strides = [1, 1]} : vector<8x128xf32> to vector<1x128xf32>
    %120 = vector.broadcast %119 : vector<1x128xf32> to vector<8x128xf32>
    %121 = arith.subf %120, %7 : vector<8x128xf32>
    %122 = arith.mulf %121, %121 : vector<8x128xf32>
    %123 = vector.extract_strided_slice %3 {offsets = [5, 0], sizes = [1, 128], strides = [1, 1]} : vector<8x128xf32> to vector<1x128xf32>
    %124 = vector.broadcast %123 : vector<1x128xf32> to vector<8x128xf32>
    %125 = arith.subf %124, %9 : vector<8x128xf32>
    %126 = arith.mulf %125, %125 : vector<8x128xf32>
    %127 = arith.addf %122, %126 : vector<8x128xf32>
    %128 = vector.extract_strided_slice %5 {offsets = [5, 0], sizes = [1, 128], strides = [1, 1]} : vector<8x128xf32> to vector<1x128xf32>
    %129 = vector.broadcast %128 : vector<1x128xf32> to vector<8x128xf32>
    %130 = arith.subf %129, %11 : vector<8x128xf32>
    %131 = arith.mulf %130, %130 : vector<8x128xf32>
    %132 = arith.addf %127, %131 : vector<8x128xf32>
    %133 = vector.extract_strided_slice %1 {offsets = [6, 0], sizes = [1, 128], strides = [1, 1]} : vector<8x128xf32> to vector<1x128xf32>
    %134 = vector.broadcast %133 : vector<1x128xf32> to vector<8x128xf32>
    %135 = arith.subf %134, %7 : vector<8x128xf32>
    %136 = arith.mulf %135, %135 : vector<8x128xf32>
    %137 = vector.extract_strided_slice %3 {offsets = [6, 0], sizes = [1, 128], strides = [1, 1]} : vector<8x128xf32> to vector<1x128xf32>
    %138 = vector.broadcast %137 : vector<1x128xf32> to vector<8x128xf32>
    %139 = arith.subf %138, %9 : vector<8x128xf32>
    %140 = arith.mulf %139, %139 : vector<8x128xf32>
    %141 = arith.addf %136, %140 : vector<8x128xf32>
    %142 = vector.extract_strided_slice %5 {offsets = [6, 0], sizes = [1, 128], strides = [1, 1]} : vector<8x128xf32> to vector<1x128xf32>
    %143 = vector.broadcast %142 : vector<1x128xf32> to vector<8x128xf32>
    %144 = arith.subf %143, %11 : vector<8x128xf32>
    %145 = arith.mulf %144, %144 : vector<8x128xf32>
    %146 = arith.addf %141, %145 : vector<8x128xf32>
    %147 = vector.extract_strided_slice %1 {offsets = [7, 0], sizes = [1, 128], strides = [1, 1]} : vector<8x128xf32> to vector<1x128xf32>
    %148 = vector.broadcast %147 : vector<1x128xf32> to vector<8x128xf32>
    %149 = arith.subf %148, %7 : vector<8x128xf32>
    %150 = arith.mulf %149, %149 : vector<8x128xf32>
    %151 = vector.extract_strided_slice %3 {offsets = [7, 0], sizes = [1, 128], strides = [1, 1]} : vector<8x128xf32> to vector<1x128xf32>
    %152 = vector.broadcast %151 : vector<1x128xf32> to vector<8x128xf32>
    %153 = arith.subf %152, %9 : vector<8x128xf32>
    %154 = arith.mulf %153, %153 : vector<8x128xf32>
    %155 = arith.addf %150, %154 : vector<8x128xf32>
    %156 = vector.extract_strided_slice %5 {offsets = [7, 0], sizes = [1, 128], strides = [1, 1]} : vector<8x128xf32> to vector<1x128xf32>
    %157 = vector.broadcast %156 : vector<1x128xf32> to vector<8x128xf32>
    %158 = arith.subf %157, %11 : vector<8x128xf32>
    %159 = arith.mulf %158, %158 : vector<8x128xf32>
    %160 = arith.addf %155, %159 : vector<8x128xf32>
    %161 = arith.minimumf %62, %76 : vector<8x128xf32>
    %162 = arith.minimumf %161, %90 : vector<8x128xf32>
    %163 = arith.minimumf %162, %104 : vector<8x128xf32>
    %164 = arith.minimumf %163, %118 : vector<8x128xf32>
    %165 = arith.minimumf %164, %132 : vector<8x128xf32>
    %166 = arith.minimumf %165, %146 : vector<8x128xf32>
    %167 = arith.minimumf %166, %160 : vector<8x128xf32>
    %c8_i32 = arith.constant 8 : i32
    %168 = vector.broadcast %c8_i32 : i32 to vector<8x128xi32>
    %169 = arith.cmpf oeq, %62, %167 : vector<8x128xf32>
    %c0_i32 = arith.constant 0 : i32
    %c8_i32_63 = arith.constant 8 : i32
    %170 = vector.broadcast %c0_i32 : i32 to vector<8x128xi32>
    %171 = vector.broadcast %c8_i32_63 : i32 to vector<8x128xi32>
    %172 = arith.select %169, %170, %171 : vector<8x128xi1>, vector<8x128xi32>
    %173 = arith.minsi %168, %172 : vector<8x128xi32>
    %174 = arith.cmpf oeq, %76, %167 : vector<8x128xf32>
    %c1_i32 = arith.constant 1 : i32
    %c8_i32_64 = arith.constant 8 : i32
    %175 = vector.broadcast %c1_i32 : i32 to vector<8x128xi32>
    %176 = vector.broadcast %c8_i32_64 : i32 to vector<8x128xi32>
    %177 = arith.select %174, %175, %176 : vector<8x128xi1>, vector<8x128xi32>
    %178 = arith.minsi %173, %177 : vector<8x128xi32>
    %179 = arith.cmpf oeq, %90, %167 : vector<8x128xf32>
    %c2_i32 = arith.constant 2 : i32
    %c8_i32_65 = arith.constant 8 : i32
    %180 = vector.broadcast %c2_i32 : i32 to vector<8x128xi32>
    %181 = vector.broadcast %c8_i32_65 : i32 to vector<8x128xi32>
    %182 = arith.select %179, %180, %181 : vector<8x128xi1>, vector<8x128xi32>
    %183 = arith.minsi %178, %182 : vector<8x128xi32>
    %184 = arith.cmpf oeq, %104, %167 : vector<8x128xf32>
    %c3_i32 = arith.constant 3 : i32
    %c8_i32_66 = arith.constant 8 : i32
    %185 = vector.broadcast %c3_i32 : i32 to vector<8x128xi32>
    %186 = vector.broadcast %c8_i32_66 : i32 to vector<8x128xi32>
    %187 = arith.select %184, %185, %186 : vector<8x128xi1>, vector<8x128xi32>
    %188 = arith.minsi %183, %187 : vector<8x128xi32>
    %189 = arith.cmpf oeq, %118, %167 : vector<8x128xf32>
    %c4_i32 = arith.constant 4 : i32
    %c8_i32_67 = arith.constant 8 : i32
    %190 = vector.broadcast %c4_i32 : i32 to vector<8x128xi32>
    %191 = vector.broadcast %c8_i32_67 : i32 to vector<8x128xi32>
    %192 = arith.select %189, %190, %191 : vector<8x128xi1>, vector<8x128xi32>
    %193 = arith.minsi %188, %192 : vector<8x128xi32>
    %194 = arith.cmpf oeq, %132, %167 : vector<8x128xf32>
    %c5_i32 = arith.constant 5 : i32
    %c8_i32_68 = arith.constant 8 : i32
    %195 = vector.broadcast %c5_i32 : i32 to vector<8x128xi32>
    %196 = vector.broadcast %c8_i32_68 : i32 to vector<8x128xi32>
    %197 = arith.select %194, %195, %196 : vector<8x128xi1>, vector<8x128xi32>
    %198 = arith.minsi %193, %197 : vector<8x128xi32>
    %199 = arith.cmpf oeq, %146, %167 : vector<8x128xf32>
    %c6_i32 = arith.constant 6 : i32
    %c8_i32_69 = arith.constant 8 : i32
    %200 = vector.broadcast %c6_i32 : i32 to vector<8x128xi32>
    %201 = vector.broadcast %c8_i32_69 : i32 to vector<8x128xi32>
    %202 = arith.select %199, %200, %201 : vector<8x128xi1>, vector<8x128xi32>
    %203 = arith.minsi %198, %202 : vector<8x128xi32>
    %204 = arith.cmpf oeq, %160, %167 : vector<8x128xf32>
    %c7_i32 = arith.constant 7 : i32
    %c8_i32_70 = arith.constant 8 : i32
    %205 = vector.broadcast %c7_i32 : i32 to vector<8x128xi32>
    %206 = vector.broadcast %c8_i32_70 : i32 to vector<8x128xi32>
    %207 = arith.select %204, %205, %206 : vector<8x128xi1>, vector<8x128xi32>
    %208 = arith.minsi %203, %207 : vector<8x128xi32>
    %cst = arith.constant dense<0.000000e+00> : vector<128xf32>
    %209 = vector.multi_reduction <add>, %167, %cst [0] : vector<8x128xf32> to vector<128xf32>
    %210 = vector.shape_cast %209 : vector<128xf32> to vector<1x128xf32>
    %cst_71 = arith.constant 0.000000e+00 : f32
    %211 = vector.broadcast %cst_71 : f32 to vector<8x128xf32>
    %cst_72 = arith.constant dense<0x7F800000> : vector<128xf32>
    %212 = vector.multi_reduction <minimumf>, %62, %cst_72 [0] : vector<8x128xf32> to vector<128xf32>
    %213 = vector.shape_cast %212 : vector<128xf32> to vector<1x128xf32>
    %214 = vector.broadcast %213 : vector<1x128xf32> to vector<8x128xf32>
    %215 = arith.cmpf oeq, %62, %214 : vector<8x128xf32>
    %c8_i32_73 = arith.constant 8 : i32
    %216 = vector.broadcast %c8_i32_73 : i32 to vector<8x128xi32>
    %217 = arith.select %215, %48, %216 : vector<8x128xi1>, vector<8x128xi32>
    %cst_74 = arith.constant dense<2147483647> : vector<128xi32>
    %218 = vector.multi_reduction <minsi>, %217, %cst_74 [0] : vector<8x128xi32> to vector<128xi32>
    %219 = vector.shape_cast %218 : vector<128xi32> to vector<1x128xi32>
    %220 = arith.addf %210, %213 : vector<1x128xf32>
    %221 = vector.extract_strided_slice %13 {offsets = [0, 0], sizes = [1, 128], strides = [1, 1]} : vector<8x128xf32> to vector<1x128xf32>
    %222 = vector.broadcast %221 : vector<1x128xf32> to vector<8x128xf32>
    %223 = arith.mulf %222, %31 : vector<8x128xf32>
    %224 = vector.extract_strided_slice %15 {offsets = [0, 0], sizes = [1, 128], strides = [1, 1]} : vector<8x128xf32> to vector<1x128xf32>
    %225 = vector.broadcast %224 : vector<1x128xf32> to vector<8x128xf32>
    %226 = arith.mulf %225, %33 : vector<8x128xf32>
    %227 = arith.addf %223, %226 : vector<8x128xf32>
    %228 = vector.extract_strided_slice %17 {offsets = [0, 0], sizes = [1, 128], strides = [1, 1]} : vector<8x128xf32> to vector<1x128xf32>
    %229 = vector.broadcast %228 : vector<1x128xf32> to vector<8x128xf32>
    %230 = arith.mulf %229, %35 : vector<8x128xf32>
    %231 = arith.addf %227, %230 : vector<8x128xf32>
    %232 = vector.extract_strided_slice %19 {offsets = [0, 0], sizes = [1, 128], strides = [1, 1]} : vector<8x128xf32> to vector<1x128xf32>
    %233 = vector.broadcast %232 : vector<1x128xf32> to vector<8x128xf32>
    %234 = arith.mulf %233, %37 : vector<8x128xf32>
    %235 = arith.addf %231, %234 : vector<8x128xf32>
    %236 = vector.extract_strided_slice %21 {offsets = [0, 0], sizes = [1, 128], strides = [1, 1]} : vector<8x128xf32> to vector<1x128xf32>
    %237 = vector.broadcast %236 : vector<1x128xf32> to vector<8x128xf32>
    %238 = arith.mulf %237, %39 : vector<8x128xf32>
    %239 = arith.addf %235, %238 : vector<8x128xf32>
    %240 = vector.extract_strided_slice %23 {offsets = [0, 0], sizes = [1, 128], strides = [1, 1]} : vector<8x128xf32> to vector<1x128xf32>
    %241 = vector.broadcast %240 : vector<1x128xf32> to vector<8x128xf32>
    %242 = arith.mulf %241, %41 : vector<8x128xf32>
    %243 = arith.addf %239, %242 : vector<8x128xf32>
    %244 = vector.extract_strided_slice %25 {offsets = [0, 0], sizes = [1, 128], strides = [1, 1]} : vector<8x128xf32> to vector<1x128xf32>
    %245 = vector.broadcast %244 : vector<1x128xf32> to vector<8x128xf32>
    %246 = arith.mulf %245, %43 : vector<8x128xf32>
    %247 = arith.addf %243, %246 : vector<8x128xf32>
    %248 = vector.extract_strided_slice %27 {offsets = [0, 0], sizes = [1, 128], strides = [1, 1]} : vector<8x128xf32> to vector<1x128xf32>
    %249 = vector.broadcast %248 : vector<1x128xf32> to vector<8x128xf32>
    %250 = arith.mulf %249, %45 : vector<8x128xf32>
    %251 = arith.addf %247, %250 : vector<8x128xf32>
    %252 = vector.extract_strided_slice %29 {offsets = [0, 0], sizes = [1, 128], strides = [1, 1]} : vector<8x128xf32> to vector<1x128xf32>
    %253 = vector.broadcast %252 : vector<1x128xf32> to vector<8x128xf32>
    %254 = arith.mulf %253, %47 : vector<8x128xf32>
    %255 = arith.addf %251, %254 : vector<8x128xf32>
    %256 = vector.broadcast %219 : vector<1x128xi32> to vector<8x128xi32>
    %257 = arith.cmpi eq, %48, %256 : vector<8x128xi32>
    %258 = arith.extui %257 : vector<8x128xi1> to vector<8x128xi32>
    %259 = arith.sitofp %258 : vector<8x128xi32> to vector<8x128xf32>
    %c0_i32_75 = arith.constant 0 : i32
    %260 = vector.broadcast %c0_i32_75 : i32 to vector<8x128xi32>
    %261 = arith.cmpi eq, %208, %260 : vector<8x128xi32>
    %262 = arith.extui %261 : vector<8x128xi1> to vector<8x128xi32>
    %263 = arith.sitofp %262 : vector<8x128xi32> to vector<8x128xf32>
    %264 = arith.addf %259, %263 : vector<8x128xf32>
    %265 = arith.mulf %264, %255 : vector<8x128xf32>
    %266 = arith.addf %211, %265 : vector<8x128xf32>
    %cst_76 = arith.constant dense<0x7F800000> : vector<128xf32>
    %267 = vector.multi_reduction <minimumf>, %76, %cst_76 [0] : vector<8x128xf32> to vector<128xf32>
    %268 = vector.shape_cast %267 : vector<128xf32> to vector<1x128xf32>
    %269 = vector.broadcast %268 : vector<1x128xf32> to vector<8x128xf32>
    %270 = arith.cmpf oeq, %76, %269 : vector<8x128xf32>
    %c8_i32_77 = arith.constant 8 : i32
    %271 = vector.broadcast %c8_i32_77 : i32 to vector<8x128xi32>
    %272 = arith.select %270, %48, %271 : vector<8x128xi1>, vector<8x128xi32>
    %cst_78 = arith.constant dense<2147483647> : vector<128xi32>
    %273 = vector.multi_reduction <minsi>, %272, %cst_78 [0] : vector<8x128xi32> to vector<128xi32>
    %274 = vector.shape_cast %273 : vector<128xi32> to vector<1x128xi32>
    %275 = arith.addf %220, %268 : vector<1x128xf32>
    %276 = vector.extract_strided_slice %13 {offsets = [1, 0], sizes = [1, 128], strides = [1, 1]} : vector<8x128xf32> to vector<1x128xf32>
    %277 = vector.broadcast %276 : vector<1x128xf32> to vector<8x128xf32>
    %278 = arith.mulf %277, %31 : vector<8x128xf32>
    %279 = vector.extract_strided_slice %15 {offsets = [1, 0], sizes = [1, 128], strides = [1, 1]} : vector<8x128xf32> to vector<1x128xf32>
    %280 = vector.broadcast %279 : vector<1x128xf32> to vector<8x128xf32>
    %281 = arith.mulf %280, %33 : vector<8x128xf32>
    %282 = arith.addf %278, %281 : vector<8x128xf32>
    %283 = vector.extract_strided_slice %17 {offsets = [1, 0], sizes = [1, 128], strides = [1, 1]} : vector<8x128xf32> to vector<1x128xf32>
    %284 = vector.broadcast %283 : vector<1x128xf32> to vector<8x128xf32>
    %285 = arith.mulf %284, %35 : vector<8x128xf32>
    %286 = arith.addf %282, %285 : vector<8x128xf32>
    %287 = vector.extract_strided_slice %19 {offsets = [1, 0], sizes = [1, 128], strides = [1, 1]} : vector<8x128xf32> to vector<1x128xf32>
    %288 = vector.broadcast %287 : vector<1x128xf32> to vector<8x128xf32>
    %289 = arith.mulf %288, %37 : vector<8x128xf32>
    %290 = arith.addf %286, %289 : vector<8x128xf32>
    %291 = vector.extract_strided_slice %21 {offsets = [1, 0], sizes = [1, 128], strides = [1, 1]} : vector<8x128xf32> to vector<1x128xf32>
    %292 = vector.broadcast %291 : vector<1x128xf32> to vector<8x128xf32>
    %293 = arith.mulf %292, %39 : vector<8x128xf32>
    %294 = arith.addf %290, %293 : vector<8x128xf32>
    %295 = vector.extract_strided_slice %23 {offsets = [1, 0], sizes = [1, 128], strides = [1, 1]} : vector<8x128xf32> to vector<1x128xf32>
    %296 = vector.broadcast %295 : vector<1x128xf32> to vector<8x128xf32>
    %297 = arith.mulf %296, %41 : vector<8x128xf32>
    %298 = arith.addf %294, %297 : vector<8x128xf32>
    %299 = vector.extract_strided_slice %25 {offsets = [1, 0], sizes = [1, 128], strides = [1, 1]} : vector<8x128xf32> to vector<1x128xf32>
    %300 = vector.broadcast %299 : vector<1x128xf32> to vector<8x128xf32>
    %301 = arith.mulf %300, %43 : vector<8x128xf32>
    %302 = arith.addf %298, %301 : vector<8x128xf32>
    %303 = vector.extract_strided_slice %27 {offsets = [1, 0], sizes = [1, 128], strides = [1, 1]} : vector<8x128xf32> to vector<1x128xf32>
    %304 = vector.broadcast %303 : vector<1x128xf32> to vector<8x128xf32>
    %305 = arith.mulf %304, %45 : vector<8x128xf32>
    %306 = arith.addf %302, %305 : vector<8x128xf32>
    %307 = vector.extract_strided_slice %29 {offsets = [1, 0], sizes = [1, 128], strides = [1, 1]} : vector<8x128xf32> to vector<1x128xf32>
    %308 = vector.broadcast %307 : vector<1x128xf32> to vector<8x128xf32>
    %309 = arith.mulf %308, %47 : vector<8x128xf32>
    %310 = arith.addf %306, %309 : vector<8x128xf32>
    %311 = vector.broadcast %274 : vector<1x128xi32> to vector<8x128xi32>
    %312 = arith.cmpi eq, %48, %311 : vector<8x128xi32>
    %313 = arith.extui %312 : vector<8x128xi1> to vector<8x128xi32>
    %314 = arith.sitofp %313 : vector<8x128xi32> to vector<8x128xf32>
    %c1_i32_79 = arith.constant 1 : i32
    %315 = vector.broadcast %c1_i32_79 : i32 to vector<8x128xi32>
    %316 = arith.cmpi eq, %208, %315 : vector<8x128xi32>
    %317 = arith.extui %316 : vector<8x128xi1> to vector<8x128xi32>
    %318 = arith.sitofp %317 : vector<8x128xi32> to vector<8x128xf32>
    %319 = arith.addf %314, %318 : vector<8x128xf32>
    %320 = arith.mulf %319, %310 : vector<8x128xf32>
    %321 = arith.addf %266, %320 : vector<8x128xf32>
    %cst_80 = arith.constant dense<0x7F800000> : vector<128xf32>
    %322 = vector.multi_reduction <minimumf>, %90, %cst_80 [0] : vector<8x128xf32> to vector<128xf32>
    %323 = vector.shape_cast %322 : vector<128xf32> to vector<1x128xf32>
    %324 = vector.broadcast %323 : vector<1x128xf32> to vector<8x128xf32>
    %325 = arith.cmpf oeq, %90, %324 : vector<8x128xf32>
    %c8_i32_81 = arith.constant 8 : i32
    %326 = vector.broadcast %c8_i32_81 : i32 to vector<8x128xi32>
    %327 = arith.select %325, %48, %326 : vector<8x128xi1>, vector<8x128xi32>
    %cst_82 = arith.constant dense<2147483647> : vector<128xi32>
    %328 = vector.multi_reduction <minsi>, %327, %cst_82 [0] : vector<8x128xi32> to vector<128xi32>
    %329 = vector.shape_cast %328 : vector<128xi32> to vector<1x128xi32>
    %330 = arith.addf %275, %323 : vector<1x128xf32>
    %331 = vector.extract_strided_slice %13 {offsets = [2, 0], sizes = [1, 128], strides = [1, 1]} : vector<8x128xf32> to vector<1x128xf32>
    %332 = vector.broadcast %331 : vector<1x128xf32> to vector<8x128xf32>
    %333 = arith.mulf %332, %31 : vector<8x128xf32>
    %334 = vector.extract_strided_slice %15 {offsets = [2, 0], sizes = [1, 128], strides = [1, 1]} : vector<8x128xf32> to vector<1x128xf32>
    %335 = vector.broadcast %334 : vector<1x128xf32> to vector<8x128xf32>
    %336 = arith.mulf %335, %33 : vector<8x128xf32>
    %337 = arith.addf %333, %336 : vector<8x128xf32>
    %338 = vector.extract_strided_slice %17 {offsets = [2, 0], sizes = [1, 128], strides = [1, 1]} : vector<8x128xf32> to vector<1x128xf32>
    %339 = vector.broadcast %338 : vector<1x128xf32> to vector<8x128xf32>
    %340 = arith.mulf %339, %35 : vector<8x128xf32>
    %341 = arith.addf %337, %340 : vector<8x128xf32>
    %342 = vector.extract_strided_slice %19 {offsets = [2, 0], sizes = [1, 128], strides = [1, 1]} : vector<8x128xf32> to vector<1x128xf32>
    %343 = vector.broadcast %342 : vector<1x128xf32> to vector<8x128xf32>
    %344 = arith.mulf %343, %37 : vector<8x128xf32>
    %345 = arith.addf %341, %344 : vector<8x128xf32>
    %346 = vector.extract_strided_slice %21 {offsets = [2, 0], sizes = [1, 128], strides = [1, 1]} : vector<8x128xf32> to vector<1x128xf32>
    %347 = vector.broadcast %346 : vector<1x128xf32> to vector<8x128xf32>
    %348 = arith.mulf %347, %39 : vector<8x128xf32>
    %349 = arith.addf %345, %348 : vector<8x128xf32>
    %350 = vector.extract_strided_slice %23 {offsets = [2, 0], sizes = [1, 128], strides = [1, 1]} : vector<8x128xf32> to vector<1x128xf32>
    %351 = vector.broadcast %350 : vector<1x128xf32> to vector<8x128xf32>
    %352 = arith.mulf %351, %41 : vector<8x128xf32>
    %353 = arith.addf %349, %352 : vector<8x128xf32>
    %354 = vector.extract_strided_slice %25 {offsets = [2, 0], sizes = [1, 128], strides = [1, 1]} : vector<8x128xf32> to vector<1x128xf32>
    %355 = vector.broadcast %354 : vector<1x128xf32> to vector<8x128xf32>
    %356 = arith.mulf %355, %43 : vector<8x128xf32>
    %357 = arith.addf %353, %356 : vector<8x128xf32>
    %358 = vector.extract_strided_slice %27 {offsets = [2, 0], sizes = [1, 128], strides = [1, 1]} : vector<8x128xf32> to vector<1x128xf32>
    %359 = vector.broadcast %358 : vector<1x128xf32> to vector<8x128xf32>
    %360 = arith.mulf %359, %45 : vector<8x128xf32>
    %361 = arith.addf %357, %360 : vector<8x128xf32>
    %362 = vector.extract_strided_slice %29 {offsets = [2, 0], sizes = [1, 128], strides = [1, 1]} : vector<8x128xf32> to vector<1x128xf32>
    %363 = vector.broadcast %362 : vector<1x128xf32> to vector<8x128xf32>
    %364 = arith.mulf %363, %47 : vector<8x128xf32>
    %365 = arith.addf %361, %364 : vector<8x128xf32>
    %366 = vector.broadcast %329 : vector<1x128xi32> to vector<8x128xi32>
    %367 = arith.cmpi eq, %48, %366 : vector<8x128xi32>
    %368 = arith.extui %367 : vector<8x128xi1> to vector<8x128xi32>
    %369 = arith.sitofp %368 : vector<8x128xi32> to vector<8x128xf32>
    %c2_i32_83 = arith.constant 2 : i32
    %370 = vector.broadcast %c2_i32_83 : i32 to vector<8x128xi32>
    %371 = arith.cmpi eq, %208, %370 : vector<8x128xi32>
    %372 = arith.extui %371 : vector<8x128xi1> to vector<8x128xi32>
    %373 = arith.sitofp %372 : vector<8x128xi32> to vector<8x128xf32>
    %374 = arith.addf %369, %373 : vector<8x128xf32>
    %375 = arith.mulf %374, %365 : vector<8x128xf32>
    %376 = arith.addf %321, %375 : vector<8x128xf32>
    %cst_84 = arith.constant dense<0x7F800000> : vector<128xf32>
    %377 = vector.multi_reduction <minimumf>, %104, %cst_84 [0] : vector<8x128xf32> to vector<128xf32>
    %378 = vector.shape_cast %377 : vector<128xf32> to vector<1x128xf32>
    %379 = vector.broadcast %378 : vector<1x128xf32> to vector<8x128xf32>
    %380 = arith.cmpf oeq, %104, %379 : vector<8x128xf32>
    %c8_i32_85 = arith.constant 8 : i32
    %381 = vector.broadcast %c8_i32_85 : i32 to vector<8x128xi32>
    %382 = arith.select %380, %48, %381 : vector<8x128xi1>, vector<8x128xi32>
    %cst_86 = arith.constant dense<2147483647> : vector<128xi32>
    %383 = vector.multi_reduction <minsi>, %382, %cst_86 [0] : vector<8x128xi32> to vector<128xi32>
    %384 = vector.shape_cast %383 : vector<128xi32> to vector<1x128xi32>
    %385 = arith.addf %330, %378 : vector<1x128xf32>
    %386 = vector.extract_strided_slice %13 {offsets = [3, 0], sizes = [1, 128], strides = [1, 1]} : vector<8x128xf32> to vector<1x128xf32>
    %387 = vector.broadcast %386 : vector<1x128xf32> to vector<8x128xf32>
    %388 = arith.mulf %387, %31 : vector<8x128xf32>
    %389 = vector.extract_strided_slice %15 {offsets = [3, 0], sizes = [1, 128], strides = [1, 1]} : vector<8x128xf32> to vector<1x128xf32>
    %390 = vector.broadcast %389 : vector<1x128xf32> to vector<8x128xf32>
    %391 = arith.mulf %390, %33 : vector<8x128xf32>
    %392 = arith.addf %388, %391 : vector<8x128xf32>
    %393 = vector.extract_strided_slice %17 {offsets = [3, 0], sizes = [1, 128], strides = [1, 1]} : vector<8x128xf32> to vector<1x128xf32>
    %394 = vector.broadcast %393 : vector<1x128xf32> to vector<8x128xf32>
    %395 = arith.mulf %394, %35 : vector<8x128xf32>
    %396 = arith.addf %392, %395 : vector<8x128xf32>
    %397 = vector.extract_strided_slice %19 {offsets = [3, 0], sizes = [1, 128], strides = [1, 1]} : vector<8x128xf32> to vector<1x128xf32>
    %398 = vector.broadcast %397 : vector<1x128xf32> to vector<8x128xf32>
    %399 = arith.mulf %398, %37 : vector<8x128xf32>
    %400 = arith.addf %396, %399 : vector<8x128xf32>
    %401 = vector.extract_strided_slice %21 {offsets = [3, 0], sizes = [1, 128], strides = [1, 1]} : vector<8x128xf32> to vector<1x128xf32>
    %402 = vector.broadcast %401 : vector<1x128xf32> to vector<8x128xf32>
    %403 = arith.mulf %402, %39 : vector<8x128xf32>
    %404 = arith.addf %400, %403 : vector<8x128xf32>
    %405 = vector.extract_strided_slice %23 {offsets = [3, 0], sizes = [1, 128], strides = [1, 1]} : vector<8x128xf32> to vector<1x128xf32>
    %406 = vector.broadcast %405 : vector<1x128xf32> to vector<8x128xf32>
    %407 = arith.mulf %406, %41 : vector<8x128xf32>
    %408 = arith.addf %404, %407 : vector<8x128xf32>
    %409 = vector.extract_strided_slice %25 {offsets = [3, 0], sizes = [1, 128], strides = [1, 1]} : vector<8x128xf32> to vector<1x128xf32>
    %410 = vector.broadcast %409 : vector<1x128xf32> to vector<8x128xf32>
    %411 = arith.mulf %410, %43 : vector<8x128xf32>
    %412 = arith.addf %408, %411 : vector<8x128xf32>
    %413 = vector.extract_strided_slice %27 {offsets = [3, 0], sizes = [1, 128], strides = [1, 1]} : vector<8x128xf32> to vector<1x128xf32>
    %414 = vector.broadcast %413 : vector<1x128xf32> to vector<8x128xf32>
    %415 = arith.mulf %414, %45 : vector<8x128xf32>
    %416 = arith.addf %412, %415 : vector<8x128xf32>
    %417 = vector.extract_strided_slice %29 {offsets = [3, 0], sizes = [1, 128], strides = [1, 1]} : vector<8x128xf32> to vector<1x128xf32>
    %418 = vector.broadcast %417 : vector<1x128xf32> to vector<8x128xf32>
    %419 = arith.mulf %418, %47 : vector<8x128xf32>
    %420 = arith.addf %416, %419 : vector<8x128xf32>
    %421 = vector.broadcast %384 : vector<1x128xi32> to vector<8x128xi32>
    %422 = arith.cmpi eq, %48, %421 : vector<8x128xi32>
    %423 = arith.extui %422 : vector<8x128xi1> to vector<8x128xi32>
    %424 = arith.sitofp %423 : vector<8x128xi32> to vector<8x128xf32>
    %c3_i32_87 = arith.constant 3 : i32
    %425 = vector.broadcast %c3_i32_87 : i32 to vector<8x128xi32>
    %426 = arith.cmpi eq, %208, %425 : vector<8x128xi32>
    %427 = arith.extui %426 : vector<8x128xi1> to vector<8x128xi32>
    %428 = arith.sitofp %427 : vector<8x128xi32> to vector<8x128xf32>
    %429 = arith.addf %424, %428 : vector<8x128xf32>
    %430 = arith.mulf %429, %420 : vector<8x128xf32>
    %431 = arith.addf %376, %430 : vector<8x128xf32>
    %cst_88 = arith.constant dense<0x7F800000> : vector<128xf32>
    %432 = vector.multi_reduction <minimumf>, %118, %cst_88 [0] : vector<8x128xf32> to vector<128xf32>
    %433 = vector.shape_cast %432 : vector<128xf32> to vector<1x128xf32>
    %434 = vector.broadcast %433 : vector<1x128xf32> to vector<8x128xf32>
    %435 = arith.cmpf oeq, %118, %434 : vector<8x128xf32>
    %c8_i32_89 = arith.constant 8 : i32
    %436 = vector.broadcast %c8_i32_89 : i32 to vector<8x128xi32>
    %437 = arith.select %435, %48, %436 : vector<8x128xi1>, vector<8x128xi32>
    %cst_90 = arith.constant dense<2147483647> : vector<128xi32>
    %438 = vector.multi_reduction <minsi>, %437, %cst_90 [0] : vector<8x128xi32> to vector<128xi32>
    %439 = vector.shape_cast %438 : vector<128xi32> to vector<1x128xi32>
    %440 = arith.addf %385, %433 : vector<1x128xf32>
    %441 = vector.extract_strided_slice %13 {offsets = [4, 0], sizes = [1, 128], strides = [1, 1]} : vector<8x128xf32> to vector<1x128xf32>
    %442 = vector.broadcast %441 : vector<1x128xf32> to vector<8x128xf32>
    %443 = arith.mulf %442, %31 : vector<8x128xf32>
    %444 = vector.extract_strided_slice %15 {offsets = [4, 0], sizes = [1, 128], strides = [1, 1]} : vector<8x128xf32> to vector<1x128xf32>
    %445 = vector.broadcast %444 : vector<1x128xf32> to vector<8x128xf32>
    %446 = arith.mulf %445, %33 : vector<8x128xf32>
    %447 = arith.addf %443, %446 : vector<8x128xf32>
    %448 = vector.extract_strided_slice %17 {offsets = [4, 0], sizes = [1, 128], strides = [1, 1]} : vector<8x128xf32> to vector<1x128xf32>
    %449 = vector.broadcast %448 : vector<1x128xf32> to vector<8x128xf32>
    %450 = arith.mulf %449, %35 : vector<8x128xf32>
    %451 = arith.addf %447, %450 : vector<8x128xf32>
    %452 = vector.extract_strided_slice %19 {offsets = [4, 0], sizes = [1, 128], strides = [1, 1]} : vector<8x128xf32> to vector<1x128xf32>
    %453 = vector.broadcast %452 : vector<1x128xf32> to vector<8x128xf32>
    %454 = arith.mulf %453, %37 : vector<8x128xf32>
    %455 = arith.addf %451, %454 : vector<8x128xf32>
    %456 = vector.extract_strided_slice %21 {offsets = [4, 0], sizes = [1, 128], strides = [1, 1]} : vector<8x128xf32> to vector<1x128xf32>
    %457 = vector.broadcast %456 : vector<1x128xf32> to vector<8x128xf32>
    %458 = arith.mulf %457, %39 : vector<8x128xf32>
    %459 = arith.addf %455, %458 : vector<8x128xf32>
    %460 = vector.extract_strided_slice %23 {offsets = [4, 0], sizes = [1, 128], strides = [1, 1]} : vector<8x128xf32> to vector<1x128xf32>
    %461 = vector.broadcast %460 : vector<1x128xf32> to vector<8x128xf32>
    %462 = arith.mulf %461, %41 : vector<8x128xf32>
    %463 = arith.addf %459, %462 : vector<8x128xf32>
    %464 = vector.extract_strided_slice %25 {offsets = [4, 0], sizes = [1, 128], strides = [1, 1]} : vector<8x128xf32> to vector<1x128xf32>
    %465 = vector.broadcast %464 : vector<1x128xf32> to vector<8x128xf32>
    %466 = arith.mulf %465, %43 : vector<8x128xf32>
    %467 = arith.addf %463, %466 : vector<8x128xf32>
    %468 = vector.extract_strided_slice %27 {offsets = [4, 0], sizes = [1, 128], strides = [1, 1]} : vector<8x128xf32> to vector<1x128xf32>
    %469 = vector.broadcast %468 : vector<1x128xf32> to vector<8x128xf32>
    %470 = arith.mulf %469, %45 : vector<8x128xf32>
    %471 = arith.addf %467, %470 : vector<8x128xf32>
    %472 = vector.extract_strided_slice %29 {offsets = [4, 0], sizes = [1, 128], strides = [1, 1]} : vector<8x128xf32> to vector<1x128xf32>
    %473 = vector.broadcast %472 : vector<1x128xf32> to vector<8x128xf32>
    %474 = arith.mulf %473, %47 : vector<8x128xf32>
    %475 = arith.addf %471, %474 : vector<8x128xf32>
    %476 = vector.broadcast %439 : vector<1x128xi32> to vector<8x128xi32>
    %477 = arith.cmpi eq, %48, %476 : vector<8x128xi32>
    %478 = arith.extui %477 : vector<8x128xi1> to vector<8x128xi32>
    %479 = arith.sitofp %478 : vector<8x128xi32> to vector<8x128xf32>
    %c4_i32_91 = arith.constant 4 : i32
    %480 = vector.broadcast %c4_i32_91 : i32 to vector<8x128xi32>
    %481 = arith.cmpi eq, %208, %480 : vector<8x128xi32>
    %482 = arith.extui %481 : vector<8x128xi1> to vector<8x128xi32>
    %483 = arith.sitofp %482 : vector<8x128xi32> to vector<8x128xf32>
    %484 = arith.addf %479, %483 : vector<8x128xf32>
    %485 = arith.mulf %484, %475 : vector<8x128xf32>
    %486 = arith.addf %431, %485 : vector<8x128xf32>
    %cst_92 = arith.constant dense<0x7F800000> : vector<128xf32>
    %487 = vector.multi_reduction <minimumf>, %132, %cst_92 [0] : vector<8x128xf32> to vector<128xf32>
    %488 = vector.shape_cast %487 : vector<128xf32> to vector<1x128xf32>
    %489 = vector.broadcast %488 : vector<1x128xf32> to vector<8x128xf32>
    %490 = arith.cmpf oeq, %132, %489 : vector<8x128xf32>
    %c8_i32_93 = arith.constant 8 : i32
    %491 = vector.broadcast %c8_i32_93 : i32 to vector<8x128xi32>
    %492 = arith.select %490, %48, %491 : vector<8x128xi1>, vector<8x128xi32>
    %cst_94 = arith.constant dense<2147483647> : vector<128xi32>
    %493 = vector.multi_reduction <minsi>, %492, %cst_94 [0] : vector<8x128xi32> to vector<128xi32>
    %494 = vector.shape_cast %493 : vector<128xi32> to vector<1x128xi32>
    %495 = arith.addf %440, %488 : vector<1x128xf32>
    %496 = vector.extract_strided_slice %13 {offsets = [5, 0], sizes = [1, 128], strides = [1, 1]} : vector<8x128xf32> to vector<1x128xf32>
    %497 = vector.broadcast %496 : vector<1x128xf32> to vector<8x128xf32>
    %498 = arith.mulf %497, %31 : vector<8x128xf32>
    %499 = vector.extract_strided_slice %15 {offsets = [5, 0], sizes = [1, 128], strides = [1, 1]} : vector<8x128xf32> to vector<1x128xf32>
    %500 = vector.broadcast %499 : vector<1x128xf32> to vector<8x128xf32>
    %501 = arith.mulf %500, %33 : vector<8x128xf32>
    %502 = arith.addf %498, %501 : vector<8x128xf32>
    %503 = vector.extract_strided_slice %17 {offsets = [5, 0], sizes = [1, 128], strides = [1, 1]} : vector<8x128xf32> to vector<1x128xf32>
    %504 = vector.broadcast %503 : vector<1x128xf32> to vector<8x128xf32>
    %505 = arith.mulf %504, %35 : vector<8x128xf32>
    %506 = arith.addf %502, %505 : vector<8x128xf32>
    %507 = vector.extract_strided_slice %19 {offsets = [5, 0], sizes = [1, 128], strides = [1, 1]} : vector<8x128xf32> to vector<1x128xf32>
    %508 = vector.broadcast %507 : vector<1x128xf32> to vector<8x128xf32>
    %509 = arith.mulf %508, %37 : vector<8x128xf32>
    %510 = arith.addf %506, %509 : vector<8x128xf32>
    %511 = vector.extract_strided_slice %21 {offsets = [5, 0], sizes = [1, 128], strides = [1, 1]} : vector<8x128xf32> to vector<1x128xf32>
    %512 = vector.broadcast %511 : vector<1x128xf32> to vector<8x128xf32>
    %513 = arith.mulf %512, %39 : vector<8x128xf32>
    %514 = arith.addf %510, %513 : vector<8x128xf32>
    %515 = vector.extract_strided_slice %23 {offsets = [5, 0], sizes = [1, 128], strides = [1, 1]} : vector<8x128xf32> to vector<1x128xf32>
    %516 = vector.broadcast %515 : vector<1x128xf32> to vector<8x128xf32>
    %517 = arith.mulf %516, %41 : vector<8x128xf32>
    %518 = arith.addf %514, %517 : vector<8x128xf32>
    %519 = vector.extract_strided_slice %25 {offsets = [5, 0], sizes = [1, 128], strides = [1, 1]} : vector<8x128xf32> to vector<1x128xf32>
    %520 = vector.broadcast %519 : vector<1x128xf32> to vector<8x128xf32>
    %521 = arith.mulf %520, %43 : vector<8x128xf32>
    %522 = arith.addf %518, %521 : vector<8x128xf32>
    %523 = vector.extract_strided_slice %27 {offsets = [5, 0], sizes = [1, 128], strides = [1, 1]} : vector<8x128xf32> to vector<1x128xf32>
    %524 = vector.broadcast %523 : vector<1x128xf32> to vector<8x128xf32>
    %525 = arith.mulf %524, %45 : vector<8x128xf32>
    %526 = arith.addf %522, %525 : vector<8x128xf32>
    %527 = vector.extract_strided_slice %29 {offsets = [5, 0], sizes = [1, 128], strides = [1, 1]} : vector<8x128xf32> to vector<1x128xf32>
    %528 = vector.broadcast %527 : vector<1x128xf32> to vector<8x128xf32>
    %529 = arith.mulf %528, %47 : vector<8x128xf32>
    %530 = arith.addf %526, %529 : vector<8x128xf32>
    %531 = vector.broadcast %494 : vector<1x128xi32> to vector<8x128xi32>
    %532 = arith.cmpi eq, %48, %531 : vector<8x128xi32>
    %533 = arith.extui %532 : vector<8x128xi1> to vector<8x128xi32>
    %534 = arith.sitofp %533 : vector<8x128xi32> to vector<8x128xf32>
    %c5_i32_95 = arith.constant 5 : i32
    %535 = vector.broadcast %c5_i32_95 : i32 to vector<8x128xi32>
    %536 = arith.cmpi eq, %208, %535 : vector<8x128xi32>
    %537 = arith.extui %536 : vector<8x128xi1> to vector<8x128xi32>
    %538 = arith.sitofp %537 : vector<8x128xi32> to vector<8x128xf32>
    %539 = arith.addf %534, %538 : vector<8x128xf32>
    %540 = arith.mulf %539, %530 : vector<8x128xf32>
    %541 = arith.addf %486, %540 : vector<8x128xf32>
    %cst_96 = arith.constant dense<0x7F800000> : vector<128xf32>
    %542 = vector.multi_reduction <minimumf>, %146, %cst_96 [0] : vector<8x128xf32> to vector<128xf32>
    %543 = vector.shape_cast %542 : vector<128xf32> to vector<1x128xf32>
    %544 = vector.broadcast %543 : vector<1x128xf32> to vector<8x128xf32>
    %545 = arith.cmpf oeq, %146, %544 : vector<8x128xf32>
    %c8_i32_97 = arith.constant 8 : i32
    %546 = vector.broadcast %c8_i32_97 : i32 to vector<8x128xi32>
    %547 = arith.select %545, %48, %546 : vector<8x128xi1>, vector<8x128xi32>
    %cst_98 = arith.constant dense<2147483647> : vector<128xi32>
    %548 = vector.multi_reduction <minsi>, %547, %cst_98 [0] : vector<8x128xi32> to vector<128xi32>
    %549 = vector.shape_cast %548 : vector<128xi32> to vector<1x128xi32>
    %550 = arith.addf %495, %543 : vector<1x128xf32>
    %551 = vector.extract_strided_slice %13 {offsets = [6, 0], sizes = [1, 128], strides = [1, 1]} : vector<8x128xf32> to vector<1x128xf32>
    %552 = vector.broadcast %551 : vector<1x128xf32> to vector<8x128xf32>
    %553 = arith.mulf %552, %31 : vector<8x128xf32>
    %554 = vector.extract_strided_slice %15 {offsets = [6, 0], sizes = [1, 128], strides = [1, 1]} : vector<8x128xf32> to vector<1x128xf32>
    %555 = vector.broadcast %554 : vector<1x128xf32> to vector<8x128xf32>
    %556 = arith.mulf %555, %33 : vector<8x128xf32>
    %557 = arith.addf %553, %556 : vector<8x128xf32>
    %558 = vector.extract_strided_slice %17 {offsets = [6, 0], sizes = [1, 128], strides = [1, 1]} : vector<8x128xf32> to vector<1x128xf32>
    %559 = vector.broadcast %558 : vector<1x128xf32> to vector<8x128xf32>
    %560 = arith.mulf %559, %35 : vector<8x128xf32>
    %561 = arith.addf %557, %560 : vector<8x128xf32>
    %562 = vector.extract_strided_slice %19 {offsets = [6, 0], sizes = [1, 128], strides = [1, 1]} : vector<8x128xf32> to vector<1x128xf32>
    %563 = vector.broadcast %562 : vector<1x128xf32> to vector<8x128xf32>
    %564 = arith.mulf %563, %37 : vector<8x128xf32>
    %565 = arith.addf %561, %564 : vector<8x128xf32>
    %566 = vector.extract_strided_slice %21 {offsets = [6, 0], sizes = [1, 128], strides = [1, 1]} : vector<8x128xf32> to vector<1x128xf32>
    %567 = vector.broadcast %566 : vector<1x128xf32> to vector<8x128xf32>
    %568 = arith.mulf %567, %39 : vector<8x128xf32>
    %569 = arith.addf %565, %568 : vector<8x128xf32>
    %570 = vector.extract_strided_slice %23 {offsets = [6, 0], sizes = [1, 128], strides = [1, 1]} : vector<8x128xf32> to vector<1x128xf32>
    %571 = vector.broadcast %570 : vector<1x128xf32> to vector<8x128xf32>
    %572 = arith.mulf %571, %41 : vector<8x128xf32>
    %573 = arith.addf %569, %572 : vector<8x128xf32>
    %574 = vector.extract_strided_slice %25 {offsets = [6, 0], sizes = [1, 128], strides = [1, 1]} : vector<8x128xf32> to vector<1x128xf32>
    %575 = vector.broadcast %574 : vector<1x128xf32> to vector<8x128xf32>
    %576 = arith.mulf %575, %43 : vector<8x128xf32>
    %577 = arith.addf %573, %576 : vector<8x128xf32>
    %578 = vector.extract_strided_slice %27 {offsets = [6, 0], sizes = [1, 128], strides = [1, 1]} : vector<8x128xf32> to vector<1x128xf32>
    %579 = vector.broadcast %578 : vector<1x128xf32> to vector<8x128xf32>
    %580 = arith.mulf %579, %45 : vector<8x128xf32>
    %581 = arith.addf %577, %580 : vector<8x128xf32>
    %582 = vector.extract_strided_slice %29 {offsets = [6, 0], sizes = [1, 128], strides = [1, 1]} : vector<8x128xf32> to vector<1x128xf32>
    %583 = vector.broadcast %582 : vector<1x128xf32> to vector<8x128xf32>
    %584 = arith.mulf %583, %47 : vector<8x128xf32>
    %585 = arith.addf %581, %584 : vector<8x128xf32>
    %586 = vector.broadcast %549 : vector<1x128xi32> to vector<8x128xi32>
    %587 = arith.cmpi eq, %48, %586 : vector<8x128xi32>
    %588 = arith.extui %587 : vector<8x128xi1> to vector<8x128xi32>
    %589 = arith.sitofp %588 : vector<8x128xi32> to vector<8x128xf32>
    %c6_i32_99 = arith.constant 6 : i32
    %590 = vector.broadcast %c6_i32_99 : i32 to vector<8x128xi32>
    %591 = arith.cmpi eq, %208, %590 : vector<8x128xi32>
    %592 = arith.extui %591 : vector<8x128xi1> to vector<8x128xi32>
    %593 = arith.sitofp %592 : vector<8x128xi32> to vector<8x128xf32>
    %594 = arith.addf %589, %593 : vector<8x128xf32>
    %595 = arith.mulf %594, %585 : vector<8x128xf32>
    %596 = arith.addf %541, %595 : vector<8x128xf32>
    %cst_100 = arith.constant dense<0x7F800000> : vector<128xf32>
    %597 = vector.multi_reduction <minimumf>, %160, %cst_100 [0] : vector<8x128xf32> to vector<128xf32>
    %598 = vector.shape_cast %597 : vector<128xf32> to vector<1x128xf32>
    %599 = vector.broadcast %598 : vector<1x128xf32> to vector<8x128xf32>
    %600 = arith.cmpf oeq, %160, %599 : vector<8x128xf32>
    %c8_i32_101 = arith.constant 8 : i32
    %601 = vector.broadcast %c8_i32_101 : i32 to vector<8x128xi32>
    %602 = arith.select %600, %48, %601 : vector<8x128xi1>, vector<8x128xi32>
    %cst_102 = arith.constant dense<2147483647> : vector<128xi32>
    %603 = vector.multi_reduction <minsi>, %602, %cst_102 [0] : vector<8x128xi32> to vector<128xi32>
    %604 = vector.shape_cast %603 : vector<128xi32> to vector<1x128xi32>
    %605 = arith.addf %550, %598 : vector<1x128xf32>
    %606 = vector.extract_strided_slice %13 {offsets = [7, 0], sizes = [1, 128], strides = [1, 1]} : vector<8x128xf32> to vector<1x128xf32>
    %607 = vector.broadcast %606 : vector<1x128xf32> to vector<8x128xf32>
    %608 = arith.mulf %607, %31 : vector<8x128xf32>
    %609 = vector.extract_strided_slice %15 {offsets = [7, 0], sizes = [1, 128], strides = [1, 1]} : vector<8x128xf32> to vector<1x128xf32>
    %610 = vector.broadcast %609 : vector<1x128xf32> to vector<8x128xf32>
    %611 = arith.mulf %610, %33 : vector<8x128xf32>
    %612 = arith.addf %608, %611 : vector<8x128xf32>
    %613 = vector.extract_strided_slice %17 {offsets = [7, 0], sizes = [1, 128], strides = [1, 1]} : vector<8x128xf32> to vector<1x128xf32>
    %614 = vector.broadcast %613 : vector<1x128xf32> to vector<8x128xf32>
    %615 = arith.mulf %614, %35 : vector<8x128xf32>
    %616 = arith.addf %612, %615 : vector<8x128xf32>
    %617 = vector.extract_strided_slice %19 {offsets = [7, 0], sizes = [1, 128], strides = [1, 1]} : vector<8x128xf32> to vector<1x128xf32>
    %618 = vector.broadcast %617 : vector<1x128xf32> to vector<8x128xf32>
    %619 = arith.mulf %618, %37 : vector<8x128xf32>
    %620 = arith.addf %616, %619 : vector<8x128xf32>
    %621 = vector.extract_strided_slice %21 {offsets = [7, 0], sizes = [1, 128], strides = [1, 1]} : vector<8x128xf32> to vector<1x128xf32>
    %622 = vector.broadcast %621 : vector<1x128xf32> to vector<8x128xf32>
    %623 = arith.mulf %622, %39 : vector<8x128xf32>
    %624 = arith.addf %620, %623 : vector<8x128xf32>
    %625 = vector.extract_strided_slice %23 {offsets = [7, 0], sizes = [1, 128], strides = [1, 1]} : vector<8x128xf32> to vector<1x128xf32>
    %626 = vector.broadcast %625 : vector<1x128xf32> to vector<8x128xf32>
    %627 = arith.mulf %626, %41 : vector<8x128xf32>
    %628 = arith.addf %624, %627 : vector<8x128xf32>
    %629 = vector.extract_strided_slice %25 {offsets = [7, 0], sizes = [1, 128], strides = [1, 1]} : vector<8x128xf32> to vector<1x128xf32>
    %630 = vector.broadcast %629 : vector<1x128xf32> to vector<8x128xf32>
    %631 = arith.mulf %630, %43 : vector<8x128xf32>
    %632 = arith.addf %628, %631 : vector<8x128xf32>
    %633 = vector.extract_strided_slice %27 {offsets = [7, 0], sizes = [1, 128], strides = [1, 1]} : vector<8x128xf32> to vector<1x128xf32>
    %634 = vector.broadcast %633 : vector<1x128xf32> to vector<8x128xf32>
    %635 = arith.mulf %634, %45 : vector<8x128xf32>
    %636 = arith.addf %632, %635 : vector<8x128xf32>
    %637 = vector.extract_strided_slice %29 {offsets = [7, 0], sizes = [1, 128], strides = [1, 1]} : vector<8x128xf32> to vector<1x128xf32>
    %638 = vector.broadcast %637 : vector<1x128xf32> to vector<8x128xf32>
    %639 = arith.mulf %638, %47 : vector<8x128xf32>
    %640 = arith.addf %636, %639 : vector<8x128xf32>
    %641 = vector.broadcast %604 : vector<1x128xi32> to vector<8x128xi32>
    %642 = arith.cmpi eq, %48, %641 : vector<8x128xi32>
    %643 = arith.extui %642 : vector<8x128xi1> to vector<8x128xi32>
    %644 = arith.sitofp %643 : vector<8x128xi32> to vector<8x128xf32>
    %c7_i32_103 = arith.constant 7 : i32
    %645 = vector.broadcast %c7_i32_103 : i32 to vector<8x128xi32>
    %646 = arith.cmpi eq, %208, %645 : vector<8x128xi32>
    %647 = arith.extui %646 : vector<8x128xi1> to vector<8x128xi32>
    %648 = arith.sitofp %647 : vector<8x128xi32> to vector<8x128xf32>
    %649 = arith.addf %644, %648 : vector<8x128xf32>
    %650 = arith.mulf %649, %640 : vector<8x128xf32>
    %651 = arith.addf %596, %650 : vector<8x128xf32>
    %cst_104 = arith.constant dense<0.000000e+00> : vector<128xf32>
    %652 = vector.multi_reduction <add>, %651, %cst_104 [0] : vector<8x128xf32> to vector<128xf32>
    %653 = vector.shape_cast %652 : vector<128xf32> to vector<1x128xf32>
    %cst_105 = arith.constant 0.000000e+00 : f32
    %654 = vector.broadcast %cst_105 : f32 to vector<1x128xf32>
    %655 = arith.subf %654, %653 : vector<1x128xf32>
    %c0_106 = arith.constant 0 : index
    %c0_107 = arith.constant 0 : index
    %656 = vector.load %arg5[%c0_106, %c0_107] : memref<32x128xf32, #tpu.memory_space<vmem>>, vector<32x128xf32>
    %c0_108 = arith.constant 0 : index
    %c0_109 = arith.constant 0 : index
    %657 = vector.load %arg6[%c0_108, %c0_109] : memref<32x128xf32, #tpu.memory_space<vmem>>, vector<32x128xf32>
    %cst_110 = arith.constant 1.000000e+00 : f32
    %658 = vector.broadcast %cst_110 : f32 to vector<32x128xf32>
    %659 = arith.addf %658, %657 : vector<32x128xf32>
    %660 = arith.mulf %656, %656 : vector<32x128xf32>
    %661 = arith.subf %659, %660 : vector<32x128xf32>
    %662 = math.exp %657 : vector<32x128xf32>
    %663 = arith.subf %661, %662 : vector<32x128xf32>
    %cst_111 = arith.constant dense<0.000000e+00> : vector<128xf32>
    %664 = vector.multi_reduction <add>, %663, %cst_111 [0] : vector<32x128xf32> to vector<128xf32>
    %665 = vector.shape_cast %664 : vector<128xf32> to vector<1x128xf32>
    %cst_112 = arith.constant -5.000000e-01 : f32
    %666 = vector.broadcast %cst_112 : f32 to vector<1x128xf32>
    %667 = arith.mulf %666, %665 : vector<1x128xf32>
    %668 = arith.maximumf %13, %15 : vector<8x128xf32>
    %669 = arith.maximumf %31, %33 : vector<8x128xf32>
    %670 = arith.maximumf %668, %17 : vector<8x128xf32>
    %671 = arith.maximumf %669, %35 : vector<8x128xf32>
    %672 = arith.maximumf %670, %19 : vector<8x128xf32>
    %673 = arith.maximumf %671, %37 : vector<8x128xf32>
    %674 = arith.maximumf %672, %21 : vector<8x128xf32>
    %675 = arith.maximumf %673, %39 : vector<8x128xf32>
    %676 = arith.maximumf %674, %23 : vector<8x128xf32>
    %677 = arith.maximumf %675, %41 : vector<8x128xf32>
    %678 = arith.maximumf %676, %25 : vector<8x128xf32>
    %679 = arith.maximumf %677, %43 : vector<8x128xf32>
    %680 = arith.maximumf %678, %27 : vector<8x128xf32>
    %681 = arith.maximumf %679, %45 : vector<8x128xf32>
    %682 = arith.maximumf %680, %29 : vector<8x128xf32>
    %683 = arith.maximumf %681, %47 : vector<8x128xf32>
    %c9_i32 = arith.constant 9 : i32
    %684 = vector.broadcast %c9_i32 : i32 to vector<8x128xi32>
    %c9_i32_113 = arith.constant 9 : i32
    %685 = vector.broadcast %c9_i32_113 : i32 to vector<8x128xi32>
    %686 = arith.cmpf oeq, %13, %682 : vector<8x128xf32>
    %c0_i32_114 = arith.constant 0 : i32
    %c9_i32_115 = arith.constant 9 : i32
    %687 = vector.broadcast %c0_i32_114 : i32 to vector<8x128xi32>
    %688 = vector.broadcast %c9_i32_115 : i32 to vector<8x128xi32>
    %689 = arith.select %686, %687, %688 : vector<8x128xi1>, vector<8x128xi32>
    %690 = arith.minsi %684, %689 : vector<8x128xi32>
    %691 = arith.cmpf oeq, %31, %683 : vector<8x128xf32>
    %c0_i32_116 = arith.constant 0 : i32
    %c9_i32_117 = arith.constant 9 : i32
    %692 = vector.broadcast %c0_i32_116 : i32 to vector<8x128xi32>
    %693 = vector.broadcast %c9_i32_117 : i32 to vector<8x128xi32>
    %694 = arith.select %691, %692, %693 : vector<8x128xi1>, vector<8x128xi32>
    %695 = arith.minsi %685, %694 : vector<8x128xi32>
    %696 = arith.cmpf oeq, %15, %682 : vector<8x128xf32>
    %c1_i32_118 = arith.constant 1 : i32
    %c9_i32_119 = arith.constant 9 : i32
    %697 = vector.broadcast %c1_i32_118 : i32 to vector<8x128xi32>
    %698 = vector.broadcast %c9_i32_119 : i32 to vector<8x128xi32>
    %699 = arith.select %696, %697, %698 : vector<8x128xi1>, vector<8x128xi32>
    %700 = arith.minsi %690, %699 : vector<8x128xi32>
    %701 = arith.cmpf oeq, %33, %683 : vector<8x128xf32>
    %c1_i32_120 = arith.constant 1 : i32
    %c9_i32_121 = arith.constant 9 : i32
    %702 = vector.broadcast %c1_i32_120 : i32 to vector<8x128xi32>
    %703 = vector.broadcast %c9_i32_121 : i32 to vector<8x128xi32>
    %704 = arith.select %701, %702, %703 : vector<8x128xi1>, vector<8x128xi32>
    %705 = arith.minsi %695, %704 : vector<8x128xi32>
    %706 = arith.cmpf oeq, %17, %682 : vector<8x128xf32>
    %c2_i32_122 = arith.constant 2 : i32
    %c9_i32_123 = arith.constant 9 : i32
    %707 = vector.broadcast %c2_i32_122 : i32 to vector<8x128xi32>
    %708 = vector.broadcast %c9_i32_123 : i32 to vector<8x128xi32>
    %709 = arith.select %706, %707, %708 : vector<8x128xi1>, vector<8x128xi32>
    %710 = arith.minsi %700, %709 : vector<8x128xi32>
    %711 = arith.cmpf oeq, %35, %683 : vector<8x128xf32>
    %c2_i32_124 = arith.constant 2 : i32
    %c9_i32_125 = arith.constant 9 : i32
    %712 = vector.broadcast %c2_i32_124 : i32 to vector<8x128xi32>
    %713 = vector.broadcast %c9_i32_125 : i32 to vector<8x128xi32>
    %714 = arith.select %711, %712, %713 : vector<8x128xi1>, vector<8x128xi32>
    %715 = arith.minsi %705, %714 : vector<8x128xi32>
    %716 = arith.cmpf oeq, %19, %682 : vector<8x128xf32>
    %c3_i32_126 = arith.constant 3 : i32
    %c9_i32_127 = arith.constant 9 : i32
    %717 = vector.broadcast %c3_i32_126 : i32 to vector<8x128xi32>
    %718 = vector.broadcast %c9_i32_127 : i32 to vector<8x128xi32>
    %719 = arith.select %716, %717, %718 : vector<8x128xi1>, vector<8x128xi32>
    %720 = arith.minsi %710, %719 : vector<8x128xi32>
    %721 = arith.cmpf oeq, %37, %683 : vector<8x128xf32>
    %c3_i32_128 = arith.constant 3 : i32
    %c9_i32_129 = arith.constant 9 : i32
    %722 = vector.broadcast %c3_i32_128 : i32 to vector<8x128xi32>
    %723 = vector.broadcast %c9_i32_129 : i32 to vector<8x128xi32>
    %724 = arith.select %721, %722, %723 : vector<8x128xi1>, vector<8x128xi32>
    %725 = arith.minsi %715, %724 : vector<8x128xi32>
    %726 = arith.cmpf oeq, %21, %682 : vector<8x128xf32>
    %c4_i32_130 = arith.constant 4 : i32
    %c9_i32_131 = arith.constant 9 : i32
    %727 = vector.broadcast %c4_i32_130 : i32 to vector<8x128xi32>
    %728 = vector.broadcast %c9_i32_131 : i32 to vector<8x128xi32>
    %729 = arith.select %726, %727, %728 : vector<8x128xi1>, vector<8x128xi32>
    %730 = arith.minsi %720, %729 : vector<8x128xi32>
    %731 = arith.cmpf oeq, %39, %683 : vector<8x128xf32>
    %c4_i32_132 = arith.constant 4 : i32
    %c9_i32_133 = arith.constant 9 : i32
    %732 = vector.broadcast %c4_i32_132 : i32 to vector<8x128xi32>
    %733 = vector.broadcast %c9_i32_133 : i32 to vector<8x128xi32>
    %734 = arith.select %731, %732, %733 : vector<8x128xi1>, vector<8x128xi32>
    %735 = arith.minsi %725, %734 : vector<8x128xi32>
    %736 = arith.cmpf oeq, %23, %682 : vector<8x128xf32>
    %c5_i32_134 = arith.constant 5 : i32
    %c9_i32_135 = arith.constant 9 : i32
    %737 = vector.broadcast %c5_i32_134 : i32 to vector<8x128xi32>
    %738 = vector.broadcast %c9_i32_135 : i32 to vector<8x128xi32>
    %739 = arith.select %736, %737, %738 : vector<8x128xi1>, vector<8x128xi32>
    %740 = arith.minsi %730, %739 : vector<8x128xi32>
    %741 = arith.cmpf oeq, %41, %683 : vector<8x128xf32>
    %c5_i32_136 = arith.constant 5 : i32
    %c9_i32_137 = arith.constant 9 : i32
    %742 = vector.broadcast %c5_i32_136 : i32 to vector<8x128xi32>
    %743 = vector.broadcast %c9_i32_137 : i32 to vector<8x128xi32>
    %744 = arith.select %741, %742, %743 : vector<8x128xi1>, vector<8x128xi32>
    %745 = arith.minsi %735, %744 : vector<8x128xi32>
    %746 = arith.cmpf oeq, %25, %682 : vector<8x128xf32>
    %c6_i32_138 = arith.constant 6 : i32
    %c9_i32_139 = arith.constant 9 : i32
    %747 = vector.broadcast %c6_i32_138 : i32 to vector<8x128xi32>
    %748 = vector.broadcast %c9_i32_139 : i32 to vector<8x128xi32>
    %749 = arith.select %746, %747, %748 : vector<8x128xi1>, vector<8x128xi32>
    %750 = arith.minsi %740, %749 : vector<8x128xi32>
    %751 = arith.cmpf oeq, %43, %683 : vector<8x128xf32>
    %c6_i32_140 = arith.constant 6 : i32
    %c9_i32_141 = arith.constant 9 : i32
    %752 = vector.broadcast %c6_i32_140 : i32 to vector<8x128xi32>
    %753 = vector.broadcast %c9_i32_141 : i32 to vector<8x128xi32>
    %754 = arith.select %751, %752, %753 : vector<8x128xi1>, vector<8x128xi32>
    %755 = arith.minsi %745, %754 : vector<8x128xi32>
    %756 = arith.cmpf oeq, %27, %682 : vector<8x128xf32>
    %c7_i32_142 = arith.constant 7 : i32
    %c9_i32_143 = arith.constant 9 : i32
    %757 = vector.broadcast %c7_i32_142 : i32 to vector<8x128xi32>
    %758 = vector.broadcast %c9_i32_143 : i32 to vector<8x128xi32>
    %759 = arith.select %756, %757, %758 : vector<8x128xi1>, vector<8x128xi32>
    %760 = arith.minsi %750, %759 : vector<8x128xi32>
    %761 = arith.cmpf oeq, %45, %683 : vector<8x128xf32>
    %c7_i32_144 = arith.constant 7 : i32
    %c9_i32_145 = arith.constant 9 : i32
    %762 = vector.broadcast %c7_i32_144 : i32 to vector<8x128xi32>
    %763 = vector.broadcast %c9_i32_145 : i32 to vector<8x128xi32>
    %764 = arith.select %761, %762, %763 : vector<8x128xi1>, vector<8x128xi32>
    %765 = arith.minsi %755, %764 : vector<8x128xi32>
    %766 = arith.cmpf oeq, %29, %682 : vector<8x128xf32>
    %c8_i32_146 = arith.constant 8 : i32
    %c9_i32_147 = arith.constant 9 : i32
    %767 = vector.broadcast %c8_i32_146 : i32 to vector<8x128xi32>
    %768 = vector.broadcast %c9_i32_147 : i32 to vector<8x128xi32>
    %769 = arith.select %766, %767, %768 : vector<8x128xi1>, vector<8x128xi32>
    %770 = arith.minsi %760, %769 : vector<8x128xi32>
    %771 = arith.cmpf oeq, %47, %683 : vector<8x128xf32>
    %c8_i32_148 = arith.constant 8 : i32
    %c9_i32_149 = arith.constant 9 : i32
    %772 = vector.broadcast %c8_i32_148 : i32 to vector<8x128xi32>
    %773 = vector.broadcast %c9_i32_149 : i32 to vector<8x128xi32>
    %774 = arith.select %771, %772, %773 : vector<8x128xi1>, vector<8x128xi32>
    %775 = arith.minsi %765, %774 : vector<8x128xi32>
    %cst_150 = arith.constant 0.000000e+00 : f32
    %776 = vector.broadcast %cst_150 : f32 to vector<1x128xf32>
    %c0_i32_151 = arith.constant 0 : i32
    %777 = vector.broadcast %c0_i32_151 : i32 to vector<8x128xi32>
    %778 = arith.cmpi eq, %770, %777 : vector<8x128xi32>
    %779 = arith.extui %778 : vector<8x128xi1> to vector<8x128xi32>
    %780 = arith.sitofp %779 : vector<8x128xi32> to vector<8x128xf32>
    %cst_152 = arith.constant dense<0.000000e+00> : vector<128xf32>
    %781 = vector.multi_reduction <add>, %780, %cst_152 [0] : vector<8x128xf32> to vector<128xf32>
    %782 = vector.shape_cast %781 : vector<128xf32> to vector<1x128xf32>
    %c0_i32_153 = arith.constant 0 : i32
    %783 = vector.broadcast %c0_i32_153 : i32 to vector<8x128xi32>
    %784 = arith.cmpi eq, %775, %783 : vector<8x128xi32>
    %785 = arith.extui %784 : vector<8x128xi1> to vector<8x128xi32>
    %786 = arith.sitofp %785 : vector<8x128xi32> to vector<8x128xf32>
    %cst_154 = arith.constant dense<0.000000e+00> : vector<128xf32>
    %787 = vector.multi_reduction <add>, %786, %cst_154 [0] : vector<8x128xf32> to vector<128xf32>
    %788 = vector.shape_cast %787 : vector<128xf32> to vector<1x128xf32>
    %789 = arith.subf %788, %782 : vector<1x128xf32>
    %790 = math.absf %789 : vector<1x128xf32>
    %cst_155 = arith.constant 2.000000e+00 : f32
    %791 = vector.broadcast %cst_155 : f32 to vector<1x128xf32>
    %792 = arith.mulf %791, %790 : vector<1x128xf32>
    %793 = arith.addf %776, %792 : vector<1x128xf32>
    %c1_i32_156 = arith.constant 1 : i32
    %794 = vector.broadcast %c1_i32_156 : i32 to vector<8x128xi32>
    %795 = arith.cmpi eq, %770, %794 : vector<8x128xi32>
    %796 = arith.extui %795 : vector<8x128xi1> to vector<8x128xi32>
    %797 = arith.sitofp %796 : vector<8x128xi32> to vector<8x128xf32>
    %cst_157 = arith.constant dense<0.000000e+00> : vector<128xf32>
    %798 = vector.multi_reduction <add>, %797, %cst_157 [0] : vector<8x128xf32> to vector<128xf32>
    %799 = vector.shape_cast %798 : vector<128xf32> to vector<1x128xf32>
    %c1_i32_158 = arith.constant 1 : i32
    %800 = vector.broadcast %c1_i32_158 : i32 to vector<8x128xi32>
    %801 = arith.cmpi eq, %775, %800 : vector<8x128xi32>
    %802 = arith.extui %801 : vector<8x128xi1> to vector<8x128xi32>
    %803 = arith.sitofp %802 : vector<8x128xi32> to vector<8x128xf32>
    %cst_159 = arith.constant dense<0.000000e+00> : vector<128xf32>
    %804 = vector.multi_reduction <add>, %803, %cst_159 [0] : vector<8x128xf32> to vector<128xf32>
    %805 = vector.shape_cast %804 : vector<128xf32> to vector<1x128xf32>
    %806 = arith.subf %805, %799 : vector<1x128xf32>
    %807 = math.absf %806 : vector<1x128xf32>
    %cst_160 = arith.constant 1.000000e+00 : f32
    %808 = vector.broadcast %cst_160 : f32 to vector<1x128xf32>
    %809 = arith.mulf %808, %807 : vector<1x128xf32>
    %810 = arith.addf %793, %809 : vector<1x128xf32>
    %c2_i32_161 = arith.constant 2 : i32
    %811 = vector.broadcast %c2_i32_161 : i32 to vector<8x128xi32>
    %812 = arith.cmpi eq, %770, %811 : vector<8x128xi32>
    %813 = arith.extui %812 : vector<8x128xi1> to vector<8x128xi32>
    %814 = arith.sitofp %813 : vector<8x128xi32> to vector<8x128xf32>
    %cst_162 = arith.constant dense<0.000000e+00> : vector<128xf32>
    %815 = vector.multi_reduction <add>, %814, %cst_162 [0] : vector<8x128xf32> to vector<128xf32>
    %816 = vector.shape_cast %815 : vector<128xf32> to vector<1x128xf32>
    %c2_i32_163 = arith.constant 2 : i32
    %817 = vector.broadcast %c2_i32_163 : i32 to vector<8x128xi32>
    %818 = arith.cmpi eq, %775, %817 : vector<8x128xi32>
    %819 = arith.extui %818 : vector<8x128xi1> to vector<8x128xi32>
    %820 = arith.sitofp %819 : vector<8x128xi32> to vector<8x128xf32>
    %cst_164 = arith.constant dense<0.000000e+00> : vector<128xf32>
    %821 = vector.multi_reduction <add>, %820, %cst_164 [0] : vector<8x128xf32> to vector<128xf32>
    %822 = vector.shape_cast %821 : vector<128xf32> to vector<1x128xf32>
    %823 = arith.subf %822, %816 : vector<1x128xf32>
    %824 = math.absf %823 : vector<1x128xf32>
    %cst_165 = arith.constant 1.000000e+00 : f32
    %825 = vector.broadcast %cst_165 : f32 to vector<1x128xf32>
    %826 = arith.mulf %825, %824 : vector<1x128xf32>
    %827 = arith.addf %810, %826 : vector<1x128xf32>
    %c3_i32_166 = arith.constant 3 : i32
    %828 = vector.broadcast %c3_i32_166 : i32 to vector<8x128xi32>
    %829 = arith.cmpi eq, %770, %828 : vector<8x128xi32>
    %830 = arith.extui %829 : vector<8x128xi1> to vector<8x128xi32>
    %831 = arith.sitofp %830 : vector<8x128xi32> to vector<8x128xf32>
    %cst_167 = arith.constant dense<0.000000e+00> : vector<128xf32>
    %832 = vector.multi_reduction <add>, %831, %cst_167 [0] : vector<8x128xf32> to vector<128xf32>
    %833 = vector.shape_cast %832 : vector<128xf32> to vector<1x128xf32>
    %c3_i32_168 = arith.constant 3 : i32
    %834 = vector.broadcast %c3_i32_168 : i32 to vector<8x128xi32>
    %835 = arith.cmpi eq, %775, %834 : vector<8x128xi32>
    %836 = arith.extui %835 : vector<8x128xi1> to vector<8x128xi32>
    %837 = arith.sitofp %836 : vector<8x128xi32> to vector<8x128xf32>
    %cst_169 = arith.constant dense<0.000000e+00> : vector<128xf32>
    %838 = vector.multi_reduction <add>, %837, %cst_169 [0] : vector<8x128xf32> to vector<128xf32>
    %839 = vector.shape_cast %838 : vector<128xf32> to vector<1x128xf32>
    %840 = arith.subf %839, %833 : vector<1x128xf32>
    %841 = math.absf %840 : vector<1x128xf32>
    %cst_170 = arith.constant 1.000000e+00 : f32
    %842 = vector.broadcast %cst_170 : f32 to vector<1x128xf32>
    %843 = arith.mulf %842, %841 : vector<1x128xf32>
    %844 = arith.addf %827, %843 : vector<1x128xf32>
    %c4_i32_171 = arith.constant 4 : i32
    %845 = vector.broadcast %c4_i32_171 : i32 to vector<8x128xi32>
    %846 = arith.cmpi eq, %770, %845 : vector<8x128xi32>
    %847 = arith.extui %846 : vector<8x128xi1> to vector<8x128xi32>
    %848 = arith.sitofp %847 : vector<8x128xi32> to vector<8x128xf32>
    %cst_172 = arith.constant dense<0.000000e+00> : vector<128xf32>
    %849 = vector.multi_reduction <add>, %848, %cst_172 [0] : vector<8x128xf32> to vector<128xf32>
    %850 = vector.shape_cast %849 : vector<128xf32> to vector<1x128xf32>
    %c4_i32_173 = arith.constant 4 : i32
    %851 = vector.broadcast %c4_i32_173 : i32 to vector<8x128xi32>
    %852 = arith.cmpi eq, %775, %851 : vector<8x128xi32>
    %853 = arith.extui %852 : vector<8x128xi1> to vector<8x128xi32>
    %854 = arith.sitofp %853 : vector<8x128xi32> to vector<8x128xf32>
    %cst_174 = arith.constant dense<0.000000e+00> : vector<128xf32>
    %855 = vector.multi_reduction <add>, %854, %cst_174 [0] : vector<8x128xf32> to vector<128xf32>
    %856 = vector.shape_cast %855 : vector<128xf32> to vector<1x128xf32>
    %857 = arith.subf %856, %850 : vector<1x128xf32>
    %858 = math.absf %857 : vector<1x128xf32>
    %cst_175 = arith.constant 1.000000e+00 : f32
    %859 = vector.broadcast %cst_175 : f32 to vector<1x128xf32>
    %860 = arith.mulf %859, %858 : vector<1x128xf32>
    %861 = arith.addf %844, %860 : vector<1x128xf32>
    %c5_i32_176 = arith.constant 5 : i32
    %862 = vector.broadcast %c5_i32_176 : i32 to vector<8x128xi32>
    %863 = arith.cmpi eq, %770, %862 : vector<8x128xi32>
    %864 = arith.extui %863 : vector<8x128xi1> to vector<8x128xi32>
    %865 = arith.sitofp %864 : vector<8x128xi32> to vector<8x128xf32>
    %cst_177 = arith.constant dense<0.000000e+00> : vector<128xf32>
    %866 = vector.multi_reduction <add>, %865, %cst_177 [0] : vector<8x128xf32> to vector<128xf32>
    %867 = vector.shape_cast %866 : vector<128xf32> to vector<1x128xf32>
    %c5_i32_178 = arith.constant 5 : i32
    %868 = vector.broadcast %c5_i32_178 : i32 to vector<8x128xi32>
    %869 = arith.cmpi eq, %775, %868 : vector<8x128xi32>
    %870 = arith.extui %869 : vector<8x128xi1> to vector<8x128xi32>
    %871 = arith.sitofp %870 : vector<8x128xi32> to vector<8x128xf32>
    %cst_179 = arith.constant dense<0.000000e+00> : vector<128xf32>
    %872 = vector.multi_reduction <add>, %871, %cst_179 [0] : vector<8x128xf32> to vector<128xf32>
    %873 = vector.shape_cast %872 : vector<128xf32> to vector<1x128xf32>
    %874 = arith.subf %873, %867 : vector<1x128xf32>
    %875 = math.absf %874 : vector<1x128xf32>
    %cst_180 = arith.constant 1.000000e+00 : f32
    %876 = vector.broadcast %cst_180 : f32 to vector<1x128xf32>
    %877 = arith.mulf %876, %875 : vector<1x128xf32>
    %878 = arith.addf %861, %877 : vector<1x128xf32>
    %c6_i32_181 = arith.constant 6 : i32
    %879 = vector.broadcast %c6_i32_181 : i32 to vector<8x128xi32>
    %880 = arith.cmpi eq, %770, %879 : vector<8x128xi32>
    %881 = arith.extui %880 : vector<8x128xi1> to vector<8x128xi32>
    %882 = arith.sitofp %881 : vector<8x128xi32> to vector<8x128xf32>
    %cst_182 = arith.constant dense<0.000000e+00> : vector<128xf32>
    %883 = vector.multi_reduction <add>, %882, %cst_182 [0] : vector<8x128xf32> to vector<128xf32>
    %884 = vector.shape_cast %883 : vector<128xf32> to vector<1x128xf32>
    %c6_i32_183 = arith.constant 6 : i32
    %885 = vector.broadcast %c6_i32_183 : i32 to vector<8x128xi32>
    %886 = arith.cmpi eq, %775, %885 : vector<8x128xi32>
    %887 = arith.extui %886 : vector<8x128xi1> to vector<8x128xi32>
    %888 = arith.sitofp %887 : vector<8x128xi32> to vector<8x128xf32>
    %cst_184 = arith.constant dense<0.000000e+00> : vector<128xf32>
    %889 = vector.multi_reduction <add>, %888, %cst_184 [0] : vector<8x128xf32> to vector<128xf32>
    %890 = vector.shape_cast %889 : vector<128xf32> to vector<1x128xf32>
    %891 = arith.subf %890, %884 : vector<1x128xf32>
    %892 = math.absf %891 : vector<1x128xf32>
    %cst_185 = arith.constant 1.000000e+00 : f32
    %893 = vector.broadcast %cst_185 : f32 to vector<1x128xf32>
    %894 = arith.mulf %893, %892 : vector<1x128xf32>
    %895 = arith.addf %878, %894 : vector<1x128xf32>
    %c7_i32_186 = arith.constant 7 : i32
    %896 = vector.broadcast %c7_i32_186 : i32 to vector<8x128xi32>
    %897 = arith.cmpi eq, %770, %896 : vector<8x128xi32>
    %898 = arith.extui %897 : vector<8x128xi1> to vector<8x128xi32>
    %899 = arith.sitofp %898 : vector<8x128xi32> to vector<8x128xf32>
    %cst_187 = arith.constant dense<0.000000e+00> : vector<128xf32>
    %900 = vector.multi_reduction <add>, %899, %cst_187 [0] : vector<8x128xf32> to vector<128xf32>
    %901 = vector.shape_cast %900 : vector<128xf32> to vector<1x128xf32>
    %c7_i32_188 = arith.constant 7 : i32
    %902 = vector.broadcast %c7_i32_188 : i32 to vector<8x128xi32>
    %903 = arith.cmpi eq, %775, %902 : vector<8x128xi32>
    %904 = arith.extui %903 : vector<8x128xi1> to vector<8x128xi32>
    %905 = arith.sitofp %904 : vector<8x128xi32> to vector<8x128xf32>
    %cst_189 = arith.constant dense<0.000000e+00> : vector<128xf32>
    %906 = vector.multi_reduction <add>, %905, %cst_189 [0] : vector<8x128xf32> to vector<128xf32>
    %907 = vector.shape_cast %906 : vector<128xf32> to vector<1x128xf32>
    %908 = arith.subf %907, %901 : vector<1x128xf32>
    %909 = math.absf %908 : vector<1x128xf32>
    %cst_190 = arith.constant 1.000000e+00 : f32
    %910 = vector.broadcast %cst_190 : f32 to vector<1x128xf32>
    %911 = arith.mulf %910, %909 : vector<1x128xf32>
    %912 = arith.addf %895, %911 : vector<1x128xf32>
    %c8_i32_191 = arith.constant 8 : i32
    %913 = vector.broadcast %c8_i32_191 : i32 to vector<8x128xi32>
    %914 = arith.cmpi eq, %770, %913 : vector<8x128xi32>
    %915 = arith.extui %914 : vector<8x128xi1> to vector<8x128xi32>
    %916 = arith.sitofp %915 : vector<8x128xi32> to vector<8x128xf32>
    %cst_192 = arith.constant dense<0.000000e+00> : vector<128xf32>
    %917 = vector.multi_reduction <add>, %916, %cst_192 [0] : vector<8x128xf32> to vector<128xf32>
    %918 = vector.shape_cast %917 : vector<128xf32> to vector<1x128xf32>
    %c8_i32_193 = arith.constant 8 : i32
    %919 = vector.broadcast %c8_i32_193 : i32 to vector<8x128xi32>
    %920 = arith.cmpi eq, %775, %919 : vector<8x128xi32>
    %921 = arith.extui %920 : vector<8x128xi1> to vector<8x128xi32>
    %922 = arith.sitofp %921 : vector<8x128xi32> to vector<8x128xf32>
    %cst_194 = arith.constant dense<0.000000e+00> : vector<128xf32>
    %923 = vector.multi_reduction <add>, %922, %cst_194 [0] : vector<8x128xf32> to vector<128xf32>
    %924 = vector.shape_cast %923 : vector<128xf32> to vector<1x128xf32>
    %925 = arith.subf %924, %918 : vector<1x128xf32>
    %926 = math.absf %925 : vector<1x128xf32>
    %cst_195 = arith.constant 1.000000e+02 : f32
    %927 = vector.broadcast %cst_195 : f32 to vector<1x128xf32>
    %928 = arith.mulf %927, %926 : vector<1x128xf32>
    %929 = arith.addf %912, %928 : vector<1x128xf32>
    %cst_196 = arith.constant 1.000000e+00 : f32
    %930 = vector.broadcast %cst_196 : f32 to vector<1x128xf32>
    %931 = arith.mulf %930, %655 : vector<1x128xf32>
    %932 = arith.addf %605, %931 : vector<1x128xf32>
    %cst_197 = arith.constant 0.00999999977 : f32
    %933 = vector.broadcast %cst_197 : f32 to vector<1x128xf32>
    %934 = arith.mulf %933, %929 : vector<1x128xf32>
    %935 = arith.addf %932, %934 : vector<1x128xf32>
    %cst_198 = arith.constant 0.899999976 : f32
    %936 = vector.broadcast %cst_198 : f32 to vector<1x128xf32>
    %937 = arith.mulf %936, %935 : vector<1x128xf32>
    %cst_199 = arith.constant 1.000000e-01 : f32
    %938 = vector.broadcast %cst_199 : f32 to vector<1x128xf32>
    %939 = arith.mulf %938, %667 : vector<1x128xf32>
    %940 = arith.addf %937, %939 : vector<1x128xf32>
    %c0_200 = arith.constant 0 : index
    %c0_201 = arith.constant 0 : index
    %941 = vector.load %arg7[%c0_200, %c0_201] : memref<1x128xf32, #tpu.memory_space<vmem>>, vector<1x128xf32>
    tpu.vector_store %arg7[%c0_200, %c0_201], %940 {strides = array<i32>} : memref<1x128xf32, #tpu.memory_space<vmem>>, vector<1x128xf32>,
    return
  }
  func.func @transform_0(%arg0: i32) -> (i32, i32, i32) {
    %c0_i32 = arith.constant 0 : i32
    %c0_i32_0 = arith.constant 0 : i32
    %c0_i32_1 = arith.constant 0 : i32
    return %c0_i32, %c0_i32_0, %arg0 : i32, i32, i32
  }
  func.func @transform_1(%arg0: i32) -> (i32, i32, i32) {
    %c0_i32 = arith.constant 0 : i32
    %c0_i32_0 = arith.constant 0 : i32
    %c0_i32_1 = arith.constant 0 : i32
    return %c0_i32, %c0_i32_0, %arg0 : i32, i32, i32
  }
  func.func @transform_2(%arg0: i32) -> (i32, i32, i32) {
    %c0_i32 = arith.constant 0 : i32
    %c0_i32_0 = arith.constant 0 : i32
    %c0_i32_1 = arith.constant 0 : i32
    return %c0_i32, %c0_i32_0, %arg0 : i32, i32, i32
  }
  func.func @transform_3(%arg0: i32) -> (i32, i32, i32) {
    %c0_i32 = arith.constant 0 : i32
    %c0_i32_0 = arith.constant 0 : i32
    %c0_i32_1 = arith.constant 0 : i32
    return %c0_i32, %c0_i32_0, %arg0 : i32, i32, i32
  }
  func.func @transform_4(%arg0: i32) -> (i32, i32) {
    %c0_i32 = arith.constant 0 : i32
    %c0_i32_0 = arith.constant 0 : i32
    return %c0_i32, %arg0 : i32, i32
  }
  func.func @transform_5(%arg0: i32) -> (i32, i32) {
    %c0_i32 = arith.constant 0 : i32
    %c0_i32_0 = arith.constant 0 : i32
    return %c0_i32, %arg0 : i32, i32
  }
  func.func @transform_6(%arg0: i32) -> (i32, i32) {
    %c0_i32 = arith.constant 0 : i32
    %c0_i32_0 = arith.constant 0 : i32
    return %arg0, %c0_i32 : i32, i32
  }
}

</mosaic_0001>

<llo_original>
// kernel: tpu_custom_call.1
$region0: #{tpu_custom_call.1}
  #allocation0 [shape = 'u32[]', space=smem, size = 0x4, offset = 0x4, fixed_abs, tag = 'smem constant byte address 0x4 - core index']
  #allocation1 [shape = 'u32[72,128]{1,0:T(1,128)}', space=vmem, size = 0x9000, scoped, tag = 'internal scratch']
  %s0 = inlined_call_operand.hbm [shape: f32[3,8,128], index: 0, kind: input, shape index: {}]
  %s1 = inlined_call_operand.hbm [shape: f32[9,8,128], index: 1, kind: input, shape index: {}]
  %s2 = inlined_call_operand.hbm [shape: f32[3,8,128], index: 2, kind: input, shape index: {}]
  %s3 = inlined_call_operand.hbm [shape: f32[9,8,128], index: 3, kind: input, shape index: {}]
  %s4 = inlined_call_operand.hbm [shape: f32[32,128], index: 4, kind: input, shape index: {}]
  %s5 = inlined_call_operand.hbm [shape: f32[32,128], index: 5, kind: input, shape index: {}]
  %s6 = inlined_call_operand.hbm [shape: f32[1,128], index: 6, kind: output, shape index: {}]
  %s7 = sld [smem:[#allocation0]]
  $region58: #{tpu_custom_call.1} parent=0
    _
  %s9 = ssub.s32 1, %s7
  %s10 = scalar_select 0, %s9, %s7
  $region1: #{tpu_custom_call.1} parent=0
    #allocation2 [shape = 'u8[12288]{0}', space=vmem, size = 0x3000, scoped, tag = 'input window, operand 0, single buffered']
    #allocation3 [shape = 's32[1]{0}', space=sflag, size = 0x4, scoped, tag = 'scoped memory for tpu_custom_call.1']
    #allocation4 [shape = 's32[1]{0}', space=sflag, size = 0x4, scoped, tag = 'scoped memory for tpu_custom_call.1']
    #allocation5 [shape = 'u8[36864]{0}', space=vmem, size = 0x9000, scoped, tag = 'input window, operand 1, single buffered']
    #allocation6 [shape = 's32[1]{0}', space=sflag, size = 0x4, scoped, tag = 'scoped memory for tpu_custom_call.1']
    #allocation7 [shape = 'u8[12288]{0}', space=vmem, size = 0x3000, scoped, tag = 'input window, operand 2, single buffered']
    #allocation8 [shape = 'u8[36864]{0}', space=vmem, size = 0x9000, scoped, tag = 'input window, operand 3, single buffered']
    #allocation9 [shape = 's32[1]{0}', space=sflag, size = 0x4, scoped, tag = 'scoped memory for tpu_custom_call.1']
    #allocation10 [shape = 'u8[16384]{0}', space=vmem, size = 0x4000, scoped, tag = 'input window, operand 4, single buffered']
    #allocation11 [shape = 'u8[16384]{0}', space=vmem, size = 0x4000, scoped, tag = 'input window, operand 5, single buffered']
    #allocation12 [shape = 's32[1]{0}', space=sflag, size = 0x4, scoped, tag = 'scoped memory for tpu_custom_call.1']
    #allocation13 [shape = 'u8[512]{0}', space=vmem, size = 0x400, scoped, tag = 'output window, operand 0, single buffered']
    %11 = vsyncpa [#allocation3], 0
    %12 = vsyncpa [#allocation6], 0
    %13 = vsyncpa [#allocation9], 0
    %14 = vsyncpa [#allocation12], 0
    %15 = vsyncpa [#allocation4], 0
    // Predicated region
    $region2: #{tpu_custom_call.1} parent=1 // pred_check
      _
    $region3: #{tpu_custom_call.1} parent=1 // pred_check_branch
      %17 = sbr.rel (0) target = $region5
    $region4: #{tpu_custom_call.1} parent=1 // pred_region
      %19 = vsyncadd [#allocation3], 0
      %s20 = sshll.u32 %s0, 4
      %s21 = int_to_ptr.hbm [resolvable:$true] %s20
      %s22 = sshll.u32 [#allocation2], 4
      %s23 = int_to_ptr.vmem [resolvable:$true] %s22
      %28 = dma.hbm_to_vmem [thread:$0]  %s21, 384, %s23, [#allocation3], 128, 128, 8
    $region5: #{tpu_custom_call.1} parent=1 // pred_fallthru
      _
    // Predicated region
    $region6: #{tpu_custom_call.1} parent=1 // pred_check
      _
    $region7: #{tpu_custom_call.1} parent=1 // pred_check_branch
      %30 = sbr.rel (0) target = $region9
    $region8: #{tpu_custom_call.1} parent=1 // pred_region
      %32 = vsyncadd [#allocation6], 0
      %s33 = sshll.u32 %s1, 4
      %s34 = int_to_ptr.hbm [resolvable:$true] %s33
      %s35 = sshll.u32 [#allocation5], 4
      %s36 = int_to_ptr.vmem [resolvable:$true] %s35
      %41 = dma.hbm_to_vmem [thread:$0]  %s34, 1152, %s36, [#allocation6], 128, 128, 8
    $region9: #{tpu_custom_call.1} parent=1 // pred_fallthru
      _
    // Predicated region
    $region10: #{tpu_custom_call.1} parent=1 // pred_check
      _
    $region11: #{tpu_custom_call.1} parent=1 // pred_check_branch
      %43 = sbr.rel (0) target = $region13
    $region12: #{tpu_custom_call.1} parent=1 // pred_region
      %45 = vsyncadd [#allocation6], 0
      %s46 = sshll.u32 %s2, 4
      %s47 = int_to_ptr.hbm [resolvable:$true] %s46
      %s48 = sshll.u32 [#allocation7], 4
      %s49 = int_to_ptr.vmem [resolvable:$true] %s48
      %54 = dma.hbm_to_vmem [thread:$0]  %s47, 384, %s49, [#allocation6], 128, 128, 8
    $region13: #{tpu_custom_call.1} parent=1 // pred_fallthru
      _
    // Predicated region
    $region14: #{tpu_custom_call.1} parent=1 // pred_check
      _
    $region15: #{tpu_custom_call.1} parent=1 // pred_check_branch
      %56 = sbr.rel (0) target = $region17
    $region16: #{tpu_custom_call.1} parent=1 // pred_region
      %58 = vsyncadd [#allocation9], 0
      %s59 = sshll.u32 %s3, 4
      %s60 = int_to_ptr.hbm [resolvable:$true] %s59
      %s61 = sshll.u32 [#allocation8], 4
      %s62 = int_to_ptr.vmem [resolvable:$true] %s61
      %67 = dma.hbm_to_vmem [thread:$0]  %s60, 1152, %s62, [#allocation9], 128, 128, 8
    $region17: #{tpu_custom_call.1} parent=1 // pred_fallthru
      _
    // Predicated region
    $region18: #{tpu_custom_call.1} parent=1 // pred_check
      _
    $region19: #{tpu_custom_call.1} parent=1 // pred_check_branch
      %69 = sbr.rel (0) target = $region21
    $region20: #{tpu_custom_call.1} parent=1 // pred_region
      %71 = vsyncadd [#allocation9], 0
      %s72 = sshll.u32 %s4, 4
      %s73 = int_to_ptr.hbm [resolvable:$true] %s72
      %s74 = sshll.u32 [#allocation10], 4
      %s75 = int_to_ptr.vmem [resolvable:$true] %s74
      %80 = dma.hbm_to_vmem [thread:$0]  %s73, 512, %s75, [#allocation9], 128, 128, 8
    $region21: #{tpu_custom_call.1} parent=1 // pred_fallthru
      _
    // Predicated region
    $region22: #{tpu_custom_call.1} parent=1 // pred_check
      _
    $region23: #{tpu_custom_call.1} parent=1 // pred_check_branch
      %82 = sbr.rel (0) target = $region25
    $region24: #{tpu_custom_call.1} parent=1 // pred_region
      %84 = vsyncadd [#allocation12], 0
      %s85 = sshll.u32 %s5, 4
      %s86 = int_to_ptr.hbm [resolvable:$true] %s85
      %s87 = sshll.u32 [#allocation11], 4
      %s88 = int_to_ptr.vmem [resolvable:$true] %s87
      %93 = dma.hbm_to_vmem [thread:$0]  %s86, 512, %s88, [#allocation12], 128, 128, 8
    $region25: #{tpu_custom_call.1} parent=1 // pred_fallthru
      _
    // Predicated region
    $region26: #{tpu_custom_call.1} parent=1 // pred_check
      _
    $region27: #{tpu_custom_call.1} parent=1 // pred_check_branch
      %95 = sbr.rel (0) target = $region29
    $region28: #{tpu_custom_call.1} parent=1 // pred_region
      %97 = dma.done [#allocation3], 384
    $region29: #{tpu_custom_call.1} parent=1 // pred_fallthru
      _
    // Predicated region
    $region30: #{tpu_custom_call.1} parent=1 // pred_check
      _
    $region31: #{tpu_custom_call.1} parent=1 // pred_check_branch
      %99 = sbr.rel (0) target = $region33
    $region32: #{tpu_custom_call.1} parent=1 // pred_region
      %101 = dma.done [#allocation6], 1152
    $region33: #{tpu_custom_call.1} parent=1 // pred_fallthru
      _
    // Predicated region
    $region34: #{tpu_custom_call.1} parent=1 // pred_check
      _
    $region35: #{tpu_custom_call.1} parent=1 // pred_check_branch
      %103 = sbr.rel (0) target = $region37
    $region36: #{tpu_custom_call.1} parent=1 // pred_region
      %105 = dma.done [#allocation6], 384
    $region37: #{tpu_custom_call.1} parent=1 // pred_fallthru
      _
    // Predicated region
    $region38: #{tpu_custom_call.1} parent=1 // pred_check
      _
    $region39: #{tpu_custom_call.1} parent=1 // pred_check_branch
      %107 = sbr.rel (0) target = $region41
    $region40: #{tpu_custom_call.1} parent=1 // pred_region
      %109 = dma.done [#allocation9], 1152
    $region41: #{tpu_custom_call.1} parent=1 // pred_fallthru
      _
    // Predicated region
    $region42: #{tpu_custom_call.1} parent=1 // pred_check
      _
    $region43: #{tpu_custom_call.1} parent=1 // pred_check_branch
      %111 = sbr.rel (0) target = $region45
    $region44: #{tpu_custom_call.1} parent=1 // pred_region
      %113 = dma.done [#allocation9], 512
    $region45: #{tpu_custom_call.1} parent=1 // pred_fallthru
      _
    // Predicated region
    $region46: #{tpu_custom_call.1} parent=1 // pred_check
      _
    $region47: #{tpu_custom_call.1} parent=1 // pred_check_branch
      %115 = sbr.rel (0) target = $region49
    $region48: #{tpu_custom_call.1} parent=1 // pred_region
      %117 = dma.done [#allocation12], 512
    $region49: #{tpu_custom_call.1} parent=1 // pred_fallthru
      _
    %v118 = vld [vmem:[#allocation2] sm:$0xff]
    %s119 = scalar_lea.vmem [#allocation2], 8
    %v120 = vld [vmem:[%s119] sm:$0xff]
    %s121 = scalar_lea.vmem [#allocation2], 16
    %v122 = vld [vmem:[%s121] sm:$0xff]
    %v123 = vld [vmem:[#allocation7] sm:$0xff]
    %s124 = scalar_lea.vmem [#allocation7], 8
    %v125 = vld [vmem:[%s124] sm:$0xff]
    %s126 = scalar_lea.vmem [#allocation7], 16
    %v127 = vld [vmem:[%s126] sm:$0xff]
    %v128 = vld [vmem:[#allocation5] sm:$0xff]
    %s129 = scalar_lea.vmem [#allocation5], 8
    %v130 = vld [vmem:[%s129] sm:$0xff]
    %s131 = scalar_lea.vmem [#allocation5], 16
    %v132 = vld [vmem:[%s131] sm:$0xff]
    %s133 = scalar_lea.vmem [#allocation5], 24
    %v134 = vld [vmem:[%s133] sm:$0xff]
    %s135 = scalar_lea.vmem [#allocation5], 32
    %v136 = vld [vmem:[%s135] sm:$0xff]
    %s137 = scalar_lea.vmem [#allocation5], 40
    %v138 = vld [vmem:[%s137] sm:$0xff]
    %s139 = scalar_lea.vmem [#allocation5], 48
    %v140 = vld [vmem:[%s139] sm:$0xff]
    %s141 = scalar_lea.vmem [#allocation5], 56
    %v142 = vld [vmem:[%s141] sm:$0xff]
    %s143 = scalar_lea.vmem [#allocation5], 64
    %v144 = vld [vmem:[%s143] sm:$0xff]
    %v145 = vld [vmem:[#allocation8] sm:$0xff]
    %s146 = scalar_lea.vmem [#allocation8], 8
    %v147 = vld [vmem:[%s146] sm:$0xff]
    %s148 = scalar_lea.vmem [#allocation8], 16
    %v149 = vld [vmem:[%s148] sm:$0xff]
    %s150 = scalar_lea.vmem [#allocation8], 24
    %v151 = vld [vmem:[%s150] sm:$0xff]
    %s152 = scalar_lea.vmem [#allocation8], 32
    %v153 = vld [vmem:[%s152] sm:$0xff]
    %s154 = scalar_lea.vmem [#allocation8], 40
    %v155 = vld [vmem:[%s154] sm:$0xff]
    %s156 = scalar_lea.vmem [#allocation8], 48
    %v157 = vld [vmem:[%s156] sm:$0xff]
    %s158 = scalar_lea.vmem [#allocation8], 56
    %v159 = vld [vmem:[%s158] sm:$0xff]
    %s160 = scalar_lea.vmem [#allocation8], 64
    %v161 = vld [vmem:[%s160] sm:$0xff]
    %v162 = vlaneseq
    %v163 = vshrl.u32 %v162, 7
    %v164 = vperm.slane %v118, 0
    %v165 = vsub.f32 %v164, %v123
    %v166 = vmul.f32 %v165, %v165
    %v167 = vperm.slane %v120, 0
    %v168 = vsub.f32 %v167, %v125
    %v169 = vmul.f32 %v168, %v168
    %v170 = vadd.f32 %v166, %v169
    %v171 = vperm.slane %v122, 0
    %v172 = vsub.f32 %v171, %v127
    %v173 = vmul.f32 %v172, %v172
    %v174 = vadd.f32 %v170, %v173
    %v175 = vperm.slane %v118, 1
    %v176 = vsub.f32 %v175, %v123
    %v177 = vmul.f32 %v176, %v176
    %v178 = vperm.slane %v120, 1
    %v179 = vsub.f32 %v178, %v125
    %v180 = vmul.f32 %v179, %v179
    %v181 = vadd.f32 %v177, %v180
    %v182 = vperm.slane %v122, 1
    %v183 = vsub.f32 %v182, %v127
    %v184 = vmul.f32 %v183, %v183
    %v185 = vadd.f32 %v181, %v184
    %v186 = vperm.slane %v118, 2
    %v187 = vsub.f32 %v186, %v123
    %v188 = vmul.f32 %v187, %v187
    %v189 = vperm.slane %v120, 2
    %v190 = vsub.f32 %v189, %v125
    %v191 = vmul.f32 %v190, %v190
    %v192 = vadd.f32 %v188, %v191
    %v193 = vperm.slane %v122, 2
    %v194 = vsub.f32 %v193, %v127
    %v195 = vmul.f32 %v194, %v194
    %v196 = vadd.f32 %v192, %v195
    %v197 = vperm.slane %v118, 3
    %v198 = vsub.f32 %v197, %v123
    %v199 = vmul.f32 %v198, %v198
    %v200 = vperm.slane %v120, 3
    %v201 = vsub.f32 %v200, %v125
    %v202 = vmul.f32 %v201, %v201
    %v203 = vadd.f32 %v199, %v202
    %v204 = vperm.slane %v122, 3
    %v205 = vsub.f32 %v204, %v127
    %v206 = vmul.f32 %v205, %v205
    %v207 = vadd.f32 %v203, %v206
    %v208 = vperm.slane %v118, 4
    %v209 = vsub.f32 %v208, %v123
    %v210 = vmul.f32 %v209, %v209
    %v211 = vperm.slane %v120, 4
    %v212 = vsub.f32 %v211, %v125
    %v213 = vmul.f32 %v212, %v212
    %v214 = vadd.f32 %v210, %v213
    %v215 = vperm.slane %v122, 4
    %v216 = vsub.f32 %v215, %v127
    %v217 = vmul.f32 %v216, %v216
    %v218 = vadd.f32 %v214, %v217
    %v219 = vperm.slane %v118, 5
    %v220 = vsub.f32 %v219, %v123
    %v221 = vmul.f32 %v220, %v220
    %v222 = vperm.slane %v120, 5
    %v223 = vsub.f32 %v222, %v125
    %v224 = vmul.f32 %v223, %v223
    %v225 = vadd.f32 %v221, %v224
    %v226 = vperm.slane %v122, 5
    %v227 = vsub.f32 %v226, %v127
    %v228 = vmul.f32 %v227, %v227
    %v229 = vadd.f32 %v225, %v228
    %v230 = vperm.slane %v118, 6
    %v231 = vsub.f32 %v230, %v123
    %v232 = vmul.f32 %v231, %v231
    %v233 = vperm.slane %v120, 6
    %v234 = vsub.f32 %v233, %v125
    %v235 = vmul.f32 %v234, %v234
    %v236 = vadd.f32 %v232, %v235
    %v237 = vperm.slane %v122, 6
    %v238 = vsub.f32 %v237, %v127
    %v239 = vmul.f32 %v238, %v238
    %v240 = vadd.f32 %v236, %v239
    %v241 = vperm.slane %v118, 7
    %v242 = vsub.f32 %v241, %v123
    %v243 = vmul.f32 %v242, %v242
    %v244 = vperm.slane %v120, 7
    %v245 = vsub.f32 %v244, %v125
    %v246 = vmul.f32 %v245, %v245
    %v247 = vadd.f32 %v243, %v246
    %v248 = vperm.slane %v122, 7
    %v249 = vsub.f32 %v248, %v127
    %v250 = vmul.f32 %v249, %v249
    %v251 = vadd.f32 %v247, %v250
    %v252 = vmin.f32 %v174, %v185
    %v253 = vmin.f32 %v252, %v196
    %v254 = vmin.f32 %v253, %v207
    %v255 = vmin.f32 %v254, %v218
    %v256 = vmin.f32 %v255, %v229
    %v257 = vmin.f32 %v256, %v240
    %v258 = vmin.f32 %v257, %v251
    %vm259 = vcmp.eq.f32.partialorder %v174, %v258
    %v260 = vsel %vm259, 0, 8
    %v261 = vsel %vm259, %v260, 8
    %vm262 = vcmp.eq.f32.partialorder %v185, %v258
    %v263 = vsel %vm262, 1, 8
    %vm264 = vcmp.lt.s32.totalorder %v261, %v263
    %v265 = vsel %vm264, %v261, %v263
    %vm266 = vcmp.eq.f32.partialorder %v196, %v258
    %v267 = vsel %vm266, 2, 8
    %vm268 = vcmp.lt.s32.totalorder %v265, %v267
    %v269 = vsel %vm268, %v265, %v267
    %vm270 = vcmp.eq.f32.partialorder %v207, %v258
    %v271 = vsel %vm270, 3, 8
    %vm272 = vcmp.lt.s32.totalorder %v269, %v271
    %v273 = vsel %vm272, %v269, %v271
    %vm274 = vcmp.eq.f32.partialorder %v218, %v258
    %v275 = vsel %vm274, 4, 8
    %vm276 = vcmp.lt.s32.totalorder %v273, %v275
    %v277 = vsel %vm276, %v273, %v275
    %vm278 = vcmp.eq.f32.partialorder %v229, %v258
    %v279 = vsel %vm278, 5, 8
    %vm280 = vcmp.lt.s32.totalorder %v277, %v279
    %v281 = vsel %vm280, %v277, %v279
    %vm282 = vcmp.eq.f32.partialorder %v240, %v258
    %v283 = vsel %vm282, 6, 8
    %vm284 = vcmp.lt.s32.totalorder %v281, %v283
    %v285 = vsel %vm284, %v281, %v283
    %vm286 = vcmp.eq.f32.partialorder %v251, %v258
    %v287 = vsel %vm286, 7, 8
    %vm288 = vcmp.lt.s32.totalorder %v285, %v287
    %v289 = vsel %vm288, %v285, %v287
    %v290 = vrot.slane %v258, 4
    %v291 = vadd.f32 %v258, %v290
    %v292 = vrot.slane %v291, 2
    %v293 = vadd.f32 %v291, %v292
    %v294 = vrot.slane %v293, 1
    %v295 = vadd.f32 %v293, %v294
    %v296 = vrot.slane %v174, 4
    %v297 = vmin.f32 %v174, %v296
    %v298 = vrot.slane %v297, 2
    %v299 = vmin.f32 %v297, %v298
    %v300 = vrot.slane %v299, 1
    %v301 = vmin.f32 %v299, %v300
    %vm302 = vcmp.eq.f32.partialorder %v174, %v301
    %v303 = vsel %vm302, %v163, 8
    %v304 = vrot.slane %v303, 4
    %vm305 = vcmp.lt.s32.totalorder %v303, %v304
    %v306 = vsel %vm305, %v303, %v304
    %v307 = vrot.slane %v306, 2
    %vm308 = vcmp.lt.s32.totalorder %v306, %v307
    %v309 = vsel %vm308, %v306, %v307
    %v310 = vrot.slane %v309, 1
    %vm311 = vcmp.lt.s32.totalorder %v309, %v310
    %v312 = vsel %vm311, %v309, %v310
    %v313 = vadd.f32 %v295, %v301
    %v314 = vperm.slane %v128, 0
    %v315 = vmul.f32 %v314, %v145
    %v316 = vperm.slane %v130, 0
    %v317 = vmul.f32 %v316, %v147
    %v318 = vadd.f32 %v315, %v317
    %v319 = vperm.slane %v132, 0
    %v320 = vmul.f32 %v319, %v149
    %v321 = vadd.f32 %v318, %v320
    %v322 = vperm.slane %v134, 0
    %v323 = vmul.f32 %v322, %v151
    %v324 = vadd.f32 %v321, %v323
    %v325 = vperm.slane %v136, 0
    %v326 = vmul.f32 %v325, %v153
    %v327 = vadd.f32 %v324, %v326
    %v328 = vperm.slane %v138, 0
    %v329 = vmul.f32 %v328, %v155
    %v330 = vadd.f32 %v327, %v329
    %v331 = vperm.slane %v140, 0
    %v332 = vmul.f32 %v331, %v157
    %v333 = vadd.f32 %v330, %v332
    %v334 = vperm.slane %v142, 0
    %v335 = vmul.f32 %v334, %v159
    %v336 = vadd.f32 %v333, %v335
    %v337 = vperm.slane %v144, 0
    %v338 = vmul.f32 %v337, %v161
    %v339 = vadd.f32 %v336, %v338
    %vm340 = vcmp.eq.s32.totalorder %v163, %v312
    %v341 = vsel %vm340, 1, 0
    %v342 = vcvt.s32.f32 %v341
    %vm343 = vcmp.eq.s32.totalorder %v289, 0
    %v344 = vsel %vm343, 1, 0
    %v345 = vcvt.s32.f32 %v344
    %v346 = vadd.f32 %v342, %v345
    %v347 = vmul.f32 %v346, %v339
    %v348 = vadd.f32 %v347, 0.0
    %v349 = vrot.slane %v185, 4
    %v350 = vmin.f32 %v185, %v349
    %v351 = vrot.slane %v350, 2
    %v352 = vmin.f32 %v350, %v351
    %v353 = vrot.slane %v352, 1
    %v354 = vmin.f32 %v352, %v353
    %vm355 = vcmp.eq.f32.partialorder %v185, %v354
    %v356 = vsel %vm355, %v163, 8
    %v357 = vrot.slane %v356, 4
    %vm358 = vcmp.lt.s32.totalorder %v356, %v357
    %v359 = vsel %vm358, %v356, %v357
    %v360 = vrot.slane %v359, 2
    %vm361 = vcmp.lt.s32.totalorder %v359, %v360
    %v362 = vsel %vm361, %v359, %v360
    %v363 = vrot.slane %v362, 1
    %vm364 = vcmp.lt.s32.totalorder %v362, %v363
    %v365 = vsel %vm364, %v362, %v363
    %v366 = vadd.f32 %v313, %v354
    %v367 = vperm.slane %v128, 1
    %v368 = vmul.f32 %v367, %v145
    %v369 = vperm.slane %v130, 1
    %v370 = vmul.f32 %v369, %v147
    %v371 = vadd.f32 %v368, %v370
    %v372 = vperm.slane %v132, 1
    %v373 = vmul.f32 %v372, %v149
    %v374 = vadd.f32 %v371, %v373
    %v375 = vperm.slane %v134, 1
    %v376 = vmul.f32 %v375, %v151
    %v377 = vadd.f32 %v374, %v376
    %v378 = vperm.slane %v136, 1
    %v379 = vmul.f32 %v378, %v153
    %v380 = vadd.f32 %v377, %v379
    %v381 = vperm.slane %v138, 1
    %v382 = vmul.f32 %v381, %v155
    %v383 = vadd.f32 %v380, %v382
    %v384 = vperm.slane %v140, 1
    %v385 = vmul.f32 %v384, %v157
    %v386 = vadd.f32 %v383, %v385
    %v387 = vperm.slane %v142, 1
    %v388 = vmul.f32 %v387, %v159
    %v389 = vadd.f32 %v386, %v388
    %v390 = vperm.slane %v144, 1
    %v391 = vmul.f32 %v390, %v161
    %v392 = vadd.f32 %v389, %v391
    %vm393 = vcmp.eq.s32.totalorder %v163, %v365
    %v394 = vsel %vm393, 1, 0
    %v395 = vcvt.s32.f32 %v394
    %vm396 = vcmp.eq.s32.totalorder %v289, 1
    %v397 = vsel %vm396, 1, 0
    %v398 = vcvt.s32.f32 %v397
    %v399 = vadd.f32 %v395, %v398
    %v400 = vmul.f32 %v399, %v392
    %v401 = vadd.f32 %v348, %v400
    %v402 = vrot.slane %v196, 4
    %v403 = vmin.f32 %v196, %v402
    %v404 = vrot.slane %v403, 2
    %v405 = vmin.f32 %v403, %v404
    %v406 = vrot.slane %v405, 1
    %v407 = vmin.f32 %v405, %v406
    %vm408 = vcmp.eq.f32.partialorder %v196, %v407
    %v409 = vsel %vm408, %v163, 8
    %v410 = vrot.slane %v409, 4
    %vm411 = vcmp.lt.s32.totalorder %v409, %v410
    %v412 = vsel %vm411, %v409, %v410
    %v413 = vrot.slane %v412, 2
    %vm414 = vcmp.lt.s32.totalorder %v412, %v413
    %v415 = vsel %vm414, %v412, %v413
    %v416 = vrot.slane %v415, 1
    %vm417 = vcmp.lt.s32.totalorder %v415, %v416
    %v418 = vsel %vm417, %v415, %v416
    %v419 = vadd.f32 %v366, %v407
    %v420 = vperm.slane %v128, 2
    %v421 = vmul.f32 %v420, %v145
    %v422 = vperm.slane %v130, 2
    %v423 = vmul.f32 %v422, %v147
    %v424 = vadd.f32 %v421, %v423
    %v425 = vperm.slane %v132, 2
    %v426 = vmul.f32 %v425, %v149
    %v427 = vadd.f32 %v424, %v426
    %v428 = vperm.slane %v134, 2
    %v429 = vmul.f32 %v428, %v151
    %v430 = vadd.f32 %v427, %v429
    %v431 = vperm.slane %v136, 2
    %v432 = vmul.f32 %v431, %v153
    %v433 = vadd.f32 %v430, %v432
    %v434 = vperm.slane %v138, 2
    %v435 = vmul.f32 %v434, %v155
    %v436 = vadd.f32 %v433, %v435
    %v437 = vperm.slane %v140, 2
    %v438 = vmul.f32 %v437, %v157
    %v439 = vadd.f32 %v436, %v438
    %v440 = vperm.slane %v142, 2
    %v441 = vmul.f32 %v440, %v159
    %v442 = vadd.f32 %v439, %v441
    %v443 = vperm.slane %v144, 2
    %v444 = vmul.f32 %v443, %v161
    %v445 = vadd.f32 %v442, %v444
    %vm446 = vcmp.eq.s32.totalorder %v163, %v418
    %v447 = vsel %vm446, 1, 0
    %v448 = vcvt.s32.f32 %v447
    %vm449 = vcmp.eq.s32.totalorder %v289, 2
    %v450 = vsel %vm449, 1, 0
    %v451 = vcvt.s32.f32 %v450
    %v452 = vadd.f32 %v448, %v451
    %v453 = vmul.f32 %v452, %v445
    %v454 = vadd.f32 %v401, %v453
    %v455 = vrot.slane %v207, 4
    %v456 = vmin.f32 %v207, %v455
    %v457 = vrot.slane %v456, 2
    %v458 = vmin.f32 %v456, %v457
    %v459 = vrot.slane %v458, 1
    %v460 = vmin.f32 %v458, %v459
    %vm461 = vcmp.eq.f32.partialorder %v207, %v460
    %v462 = vsel %vm461, %v163, 8
    %v463 = vrot.slane %v462, 4
    %vm464 = vcmp.lt.s32.totalorder %v462, %v463
    %v465 = vsel %vm464, %v462, %v463
    %v466 = vrot.slane %v465, 2
    %vm467 = vcmp.lt.s32.totalorder %v465, %v466
    %v468 = vsel %vm467, %v465, %v466
    %v469 = vrot.slane %v468, 1
    %vm470 = vcmp.lt.s32.totalorder %v468, %v469
    %v471 = vsel %vm470, %v468, %v469
    %v472 = vadd.f32 %v419, %v460
    %v473 = vperm.slane %v128, 3
    %v474 = vmul.f32 %v473, %v145
    %v475 = vperm.slane %v130, 3
    %v476 = vmul.f32 %v475, %v147
    %v477 = vadd.f32 %v474, %v476
    %v478 = vperm.slane %v132, 3
    %v479 = vmul.f32 %v478, %v149
    %v480 = vadd.f32 %v477, %v479
    %v481 = vperm.slane %v134, 3
    %v482 = vmul.f32 %v481, %v151
    %v483 = vadd.f32 %v480, %v482
    %v484 = vperm.slane %v136, 3
    %v485 = vmul.f32 %v484, %v153
    %v486 = vadd.f32 %v483, %v485
    %v487 = vperm.slane %v138, 3
    %v488 = vmul.f32 %v487, %v155
    %v489 = vadd.f32 %v486, %v488
    %v490 = vperm.slane %v140, 3
    %v491 = vmul.f32 %v490, %v157
    %v492 = vadd.f32 %v489, %v491
    %v493 = vperm.slane %v142, 3
    %v494 = vmul.f32 %v493, %v159
    %v495 = vadd.f32 %v492, %v494
    %v496 = vperm.slane %v144, 3
    %v497 = vmul.f32 %v496, %v161
    %v498 = vadd.f32 %v495, %v497
    %vm499 = vcmp.eq.s32.totalorder %v163, %v471
    %v500 = vsel %vm499, 1, 0
    %v501 = vcvt.s32.f32 %v500
    %vm502 = vcmp.eq.s32.totalorder %v289, 3
    %v503 = vsel %vm502, 1, 0
    %v504 = vcvt.s32.f32 %v503
    %v505 = vadd.f32 %v501, %v504
    %v506 = vmul.f32 %v505, %v498
    %v507 = vadd.f32 %v454, %v506
    %v508 = vrot.slane %v218, 4
    %v509 = vmin.f32 %v218, %v508
    %v510 = vrot.slane %v509, 2
    %v511 = vmin.f32 %v509, %v510
    %v512 = vrot.slane %v511, 1
    %v513 = vmin.f32 %v511, %v512
    %vm514 = vcmp.eq.f32.partialorder %v218, %v513
    %v515 = vsel %vm514, %v163, 8
    %v516 = vrot.slane %v515, 4
    %vm517 = vcmp.lt.s32.totalorder %v515, %v516
    %v518 = vsel %vm517, %v515, %v516
    %v519 = vrot.slane %v518, 2
    %vm520 = vcmp.lt.s32.totalorder %v518, %v519
    %v521 = vsel %vm520, %v518, %v519
    %v522 = vrot.slane %v521, 1
    %vm523 = vcmp.lt.s32.totalorder %v521, %v522
    %v524 = vsel %vm523, %v521, %v522
    %v525 = vadd.f32 %v472, %v513
    %v526 = vperm.slane %v128, 4
    %v527 = vmul.f32 %v526, %v145
    %v528 = vperm.slane %v130, 4
    %v529 = vmul.f32 %v528, %v147
    %v530 = vadd.f32 %v527, %v529
    %v531 = vperm.slane %v132, 4
    %v532 = vmul.f32 %v531, %v149
    %v533 = vadd.f32 %v530, %v532
    %v534 = vperm.slane %v134, 4
    %v535 = vmul.f32 %v534, %v151
    %v536 = vadd.f32 %v533, %v535
    %v537 = vperm.slane %v136, 4
    %v538 = vmul.f32 %v537, %v153
    %v539 = vadd.f32 %v536, %v538
    %v540 = vperm.slane %v138, 4
    %v541 = vmul.f32 %v540, %v155
    %v542 = vadd.f32 %v539, %v541
    %v543 = vperm.slane %v140, 4
    %v544 = vmul.f32 %v543, %v157
    %v545 = vadd.f32 %v542, %v544
    %v546 = vperm.slane %v142, 4
    %v547 = vmul.f32 %v546, %v159
    %v548 = vadd.f32 %v545, %v547
    %v549 = vperm.slane %v144, 4
    %v550 = vmul.f32 %v549, %v161
    %v551 = vadd.f32 %v548, %v550
    %vm552 = vcmp.eq.s32.totalorder %v163, %v524
    %v553 = vsel %vm552, 1, 0
    %v554 = vcvt.s32.f32 %v553
    %vm555 = vcmp.eq.s32.totalorder %v289, 4
    %v556 = vsel %vm555, 1, 0
    %v557 = vcvt.s32.f32 %v556
    %v558 = vadd.f32 %v554, %v557
    %v559 = vmul.f32 %v558, %v551
    %v560 = vadd.f32 %v507, %v559
    %v561 = vrot.slane %v229, 4
    %v562 = vmin.f32 %v229, %v561
    %v563 = vrot.slane %v562, 2
    %v564 = vmin.f32 %v562, %v563
    %v565 = vrot.slane %v564, 1
    %v566 = vmin.f32 %v564, %v565
    %vm567 = vcmp.eq.f32.partialorder %v229, %v566
    %v568 = vsel %vm567, %v163, 8
    %v569 = vrot.slane %v568, 4
    %vm570 = vcmp.lt.s32.totalorder %v568, %v569
    %v571 = vsel %vm570, %v568, %v569
    %v572 = vrot.slane %v571, 2
    %vm573 = vcmp.lt.s32.totalorder %v571, %v572
    %v574 = vsel %vm573, %v571, %v572
    %v575 = vrot.slane %v574, 1
    %vm576 = vcmp.lt.s32.totalorder %v574, %v575
    %v577 = vsel %vm576, %v574, %v575
    %v578 = vadd.f32 %v525, %v566
    %v579 = vperm.slane %v128, 5
    %v580 = vmul.f32 %v579, %v145
    %v581 = vperm.slane %v130, 5
    %v582 = vmul.f32 %v581, %v147
    %v583 = vadd.f32 %v580, %v582
    %v584 = vperm.slane %v132, 5
    %v585 = vmul.f32 %v584, %v149
    %v586 = vadd.f32 %v583, %v585
    %v587 = vperm.slane %v134, 5
    %v588 = vmul.f32 %v587, %v151
    %v589 = vadd.f32 %v586, %v588
    %v590 = vperm.slane %v136, 5
    %v591 = vmul.f32 %v590, %v153
    %v592 = vadd.f32 %v589, %v591
    %v593 = vperm.slane %v138, 5
    %v594 = vmul.f32 %v593, %v155
    %v595 = vadd.f32 %v592, %v594
    %v596 = vperm.slane %v140, 5
    %v597 = vmul.f32 %v596, %v157
    %v598 = vadd.f32 %v595, %v597
    %v599 = vperm.slane %v142, 5
    %v600 = vmul.f32 %v599, %v159
    %v601 = vadd.f32 %v598, %v600
    %v602 = vperm.slane %v144, 5
    %v603 = vmul.f32 %v602, %v161
    %v604 = vadd.f32 %v601, %v603
    %vm605 = vcmp.eq.s32.totalorder %v163, %v577
    %v606 = vsel %vm605, 1, 0
    %v607 = vcvt.s32.f32 %v606
    %vm608 = vcmp.eq.s32.totalorder %v289, 5
    %v609 = vsel %vm608, 1, 0
    %v610 = vcvt.s32.f32 %v609
    %v611 = vadd.f32 %v607, %v610
    %v612 = vmul.f32 %v611, %v604
    %v613 = vadd.f32 %v560, %v612
    %v614 = vrot.slane %v240, 4
    %v615 = vmin.f32 %v240, %v614
    %v616 = vrot.slane %v615, 2
    %v617 = vmin.f32 %v615, %v616
    %v618 = vrot.slane %v617, 1
    %v619 = vmin.f32 %v617, %v618
    %vm620 = vcmp.eq.f32.partialorder %v240, %v619
    %v621 = vsel %vm620, %v163, 8
    %v622 = vrot.slane %v621, 4
    %vm623 = vcmp.lt.s32.totalorder %v621, %v622
    %v624 = vsel %vm623, %v621, %v622
    %v625 = vrot.slane %v624, 2
    %vm626 = vcmp.lt.s32.totalorder %v624, %v625
    %v627 = vsel %vm626, %v624, %v625
    %v628 = vrot.slane %v627, 1
    %vm629 = vcmp.lt.s32.totalorder %v627, %v628
    %v630 = vsel %vm629, %v627, %v628
    %v631 = vadd.f32 %v578, %v619
    %v632 = vperm.slane %v128, 6
    %v633 = vmul.f32 %v632, %v145
    %v634 = vperm.slane %v130, 6
    %v635 = vmul.f32 %v634, %v147
    %v636 = vadd.f32 %v633, %v635
    %v637 = vperm.slane %v132, 6
    %v638 = vmul.f32 %v637, %v149
    %v639 = vadd.f32 %v636, %v638
    %v640 = vperm.slane %v134, 6
    %v641 = vmul.f32 %v640, %v151
    %v642 = vadd.f32 %v639, %v641
    %v643 = vperm.slane %v136, 6
    %v644 = vmul.f32 %v643, %v153
    %v645 = vadd.f32 %v642, %v644
    %v646 = vperm.slane %v138, 6
    %v647 = vmul.f32 %v646, %v155
    %v648 = vadd.f32 %v645, %v647
    %v649 = vperm.slane %v140, 6
    %v650 = vmul.f32 %v649, %v157
    %v651 = vadd.f32 %v648, %v650
    %v652 = vperm.slane %v142, 6
    %v653 = vmul.f32 %v652, %v159
    %v654 = vadd.f32 %v651, %v653
    %v655 = vperm.slane %v144, 6
    %v656 = vmul.f32 %v655, %v161
    %v657 = vadd.f32 %v654, %v656
    %vm658 = vcmp.eq.s32.totalorder %v163, %v630
    %v659 = vsel %vm658, 1, 0
    %v660 = vcvt.s32.f32 %v659
    %vm661 = vcmp.eq.s32.totalorder %v289, 6
    %v662 = vsel %vm661, 1, 0
    %v663 = vcvt.s32.f32 %v662
    %v664 = vadd.f32 %v660, %v663
    %v665 = vmul.f32 %v664, %v657
    %v666 = vadd.f32 %v613, %v665
    %v667 = vrot.slane %v251, 4
    %v668 = vmin.f32 %v251, %v667
    %v669 = vrot.slane %v668, 2
    %v670 = vmin.f32 %v668, %v669
    %v671 = vrot.slane %v670, 1
    %v672 = vmin.f32 %v670, %v671
    %vm673 = vcmp.eq.f32.partialorder %v251, %v672
    %v674 = vsel %vm673, %v163, 8
    %v675 = vrot.slane %v674, 4
    %vm676 = vcmp.lt.s32.totalorder %v674, %v675
    %v677 = vsel %vm676, %v674, %v675
    %v678 = vrot.slane %v677, 2
    %vm679 = vcmp.lt.s32.totalorder %v677, %v678
    %v680 = vsel %vm679, %v677, %v678
    %v681 = vrot.slane %v680, 1
    %vm682 = vcmp.lt.s32.totalorder %v680, %v681
    %v683 = vsel %vm682, %v680, %v681
    %v684 = vadd.f32 %v631, %v672
    %v685 = vperm.slane %v128, 7
    %v686 = vmul.f32 %v685, %v145
    %v687 = vperm.slane %v130, 7
    %v688 = vmul.f32 %v687, %v147
    %v689 = vadd.f32 %v686, %v688
    %v690 = vperm.slane %v132, 7
    %v691 = vmul.f32 %v690, %v149
    %v692 = vadd.f32 %v689, %v691
    %v693 = vperm.slane %v134, 7
    %v694 = vmul.f32 %v693, %v151
    %v695 = vadd.f32 %v692, %v694
    %v696 = vperm.slane %v136, 7
    %v697 = vmul.f32 %v696, %v153
    %v698 = vadd.f32 %v695, %v697
    %v699 = vperm.slane %v138, 7
    %v700 = vmul.f32 %v699, %v155
    %v701 = vadd.f32 %v698, %v700
    %v702 = vperm.slane %v140, 7
    %v703 = vmul.f32 %v702, %v157
    %v704 = vadd.f32 %v701, %v703
    %v705 = vperm.slane %v142, 7
    %v706 = vmul.f32 %v705, %v159
    %v707 = vadd.f32 %v704, %v706
    %v708 = vperm.slane %v144, 7
    %v709 = vmul.f32 %v708, %v161
    %v710 = vadd.f32 %v707, %v709
    %vm711 = vcmp.eq.s32.totalorder %v163, %v683
    %v712 = vsel %vm711, 1, 0
    %v713 = vcvt.s32.f32 %v712
    %vm714 = vcmp.eq.s32.totalorder %v289, 7
    %v715 = vsel %vm714, 1, 0
    %v716 = vcvt.s32.f32 %v715
    %v717 = vadd.f32 %v713, %v716
    %v718 = vmul.f32 %v717, %v710
    %v719 = vadd.f32 %v666, %v718
    %v720 = vrot.slane %v719, 4
    %v721 = vadd.f32 %v719, %v720
    %v722 = vrot.slane %v721, 2
    %v723 = vadd.f32 %v721, %v722
    %v724 = vrot.slane %v723, 1
    %v725 = vadd.f32 %v723, %v724
    %v726 = vsub.f32 0.0, %v725
    %v727 = vld [vmem:[#allocation10] sm:$0xff]
    %v728 = vld [vmem:[#allocation10 + $0x8] sm:$0xff]
    %v729 = vld [vmem:[#allocation10 + $0x10] sm:$0xff]
    %v730 = vld [vmem:[#allocation10 + $0x18] sm:$0xff]
    %v731 = vld [vmem:[#allocation11] sm:$0xff]
    %v732 = vld [vmem:[#allocation11 + $0x8] sm:$0xff]
    %v733 = vld [vmem:[#allocation11 + $0x10] sm:$0xff]
    %v734 = vld [vmem:[#allocation11 + $0x18] sm:$0xff]
    %v735 = vadd.f32 %v731, 1.0
    %v736 = vadd.f32 %v732, 1.0
    %v737 = vadd.f32 %v733, 1.0
    %v738 = vadd.f32 %v734, 1.0
    %v739 = vmul.f32 %v727, %v727
    %v740 = vmul.f32 %v728, %v728
    %v741 = vmul.f32 %v729, %v729
    %v742 = vmul.f32 %v730, %v730
    %v743 = vsub.f32 %v735, %v739
    %v744 = vsub.f32 %v736, %v740
    %v745 = vsub.f32 %v737, %v741
    %v746 = vsub.f32 %v738, %v742
    %v747 = vmul.f32 %v731, 1.442695
    %v748 = vpow.pop %v747
    %v749 = vmul.f32 %v732, 1.442695
    %v750 = vpow.pop %v749
    %v751 = vmul.f32 %v733, 1.442695
    %v752 = vpow.pop %v751
    %v753 = vmul.f32 %v734, 1.442695
    %v754 = vpow.pop %v753
    %v755 = vsub.f32 %v743, %v748
    %v756 = vsub.f32 %v744, %v750
    %v757 = vsub.f32 %v745, %v752
    %v758 = vsub.f32 %v746, %v754
    %v759 = vadd.f32 %v755, %v756
    %v760 = vadd.f32 %v759, %v757
    %v761 = vadd.f32 %v760, %v758
    %v762 = vrot.slane %v761, 4
    %v763 = vadd.f32 %v761, %v762
    %v764 = vrot.slane %v763, 2
    %v765 = vadd.f32 %v763, %v764
    %v766 = vrot.slane %v765, 1
    %v767 = vadd.f32 %v765, %v766
    %v768 = vmul.f32 %v767, -0.5
    %v769 = vmax.f32 %v128, %v130
    %v770 = vmax.f32 %v145, %v147
    %v771 = vmax.f32 %v769, %v132
    %v772 = vmax.f32 %v770, %v149
    %v773 = vmax.f32 %v771, %v134
    %v774 = vmax.f32 %v772, %v151
    %v775 = vmax.f32 %v773, %v136
    %v776 = vmax.f32 %v774, %v153
    %v777 = vmax.f32 %v775, %v138
    %v778 = vmax.f32 %v776, %v155
    %v779 = vmax.f32 %v777, %v140
    %v780 = vmax.f32 %v778, %v157
    %v781 = vmax.f32 %v779, %v142
    %v782 = vmax.f32 %v780, %v159
    %v783 = vmax.f32 %v781, %v144
    %v784 = vmax.f32 %v782, %v161
    %vm785 = vcmp.eq.f32.partialorder %v128, %v783
    %v786 = vsel %vm785, 0, 9
    %v787 = vsel %vm785, %v786, 9
    %vm788 = vcmp.eq.f32.partialorder %v145, %v784
    %v789 = vsel %vm788, 0, 9
    %v790 = vsel %vm788, %v789, 9
    %vm791 = vcmp.eq.f32.partialorder %v130, %v783
    %v792 = vsel %vm791, 1, 9
    %vm793 = vcmp.lt.s32.totalorder %v787, %v792
    %v794 = vsel %vm793, %v787, %v792
    %vm795 = vcmp.eq.f32.partialorder %v147, %v784
    %v796 = vsel %vm795, 1, 9
    %vm797 = vcmp.lt.s32.totalorder %v790, %v796
    %v798 = vsel %vm797, %v790, %v796
    %vm799 = vcmp.eq.f32.partialorder %v132, %v783
    %v800 = vsel %vm799, 2, 9
    %vm801 = vcmp.lt.s32.totalorder %v794, %v800
    %v802 = vsel %vm801, %v794, %v800
    %vm803 = vcmp.eq.f32.partialorder %v149, %v784
    %v804 = vsel %vm803, 2, 9
    %vm805 = vcmp.lt.s32.totalorder %v798, %v804
    %v806 = vsel %vm805, %v798, %v804
    %vm807 = vcmp.eq.f32.partialorder %v134, %v783
    %v808 = vsel %vm807, 3, 9
    %vm809 = vcmp.lt.s32.totalorder %v802, %v808
    %v810 = vsel %vm809, %v802, %v808
    %vm811 = vcmp.eq.f32.partialorder %v151, %v784
    %v812 = vsel %vm811, 3, 9
    %vm813 = vcmp.lt.s32.totalorder %v806, %v812
    %v814 = vsel %vm813, %v806, %v812
    %vm815 = vcmp.eq.f32.partialorder %v136, %v783
    %v816 = vsel %vm815, 4, 9
    %vm817 = vcmp.lt.s32.totalorder %v810, %v816
    %v818 = vsel %vm817, %v810, %v816
    %vm819 = vcmp.eq.f32.partialorder %v153, %v784
    %v820 = vsel %vm819, 4, 9
    %vm821 = vcmp.lt.s32.totalorder %v814, %v820
    %v822 = vsel %vm821, %v814, %v820
    %vm823 = vcmp.eq.f32.partialorder %v138, %v783
    %v824 = vsel %vm823, 5, 9
    %vm825 = vcmp.lt.s32.totalorder %v818, %v824
    %v826 = vsel %vm825, %v818, %v824
    %vm827 = vcmp.eq.f32.partialorder %v155, %v784
    %v828 = vsel %vm827, 5, 9
    %vm829 = vcmp.lt.s32.totalorder %v822, %v828
    %v830 = vsel %vm829, %v822, %v828
    %vm831 = vcmp.eq.f32.partialorder %v140, %v783
    %v832 = vsel %vm831, 6, 9
    %vm833 = vcmp.lt.s32.totalorder %v826, %v832
    %v834 = vsel %vm833, %v826, %v832
    %vm835 = vcmp.eq.f32.partialorder %v157, %v784
    %v836 = vsel %vm835, 6, 9
    %vm837 = vcmp.lt.s32.totalorder %v830, %v836
    %v838 = vsel %vm837, %v830, %v836
    %vm839 = vcmp.eq.f32.partialorder %v142, %v783
    %v840 = vsel %vm839, 7, 9
    %vm841 = vcmp.lt.s32.totalorder %v834, %v840
    %v842 = vsel %vm841, %v834, %v840
    %vm843 = vcmp.eq.f32.partialorder %v159, %v784
    %v844 = vsel %vm843, 7, 9
    %vm845 = vcmp.lt.s32.totalorder %v838, %v844
    %v846 = vsel %vm845, %v838, %v844
    %vm847 = vcmp.eq.f32.partialorder %v144, %v783
    %v848 = vsel %vm847, 8, 9
    %vm849 = vcmp.lt.s32.totalorder %v842, %v848
    %v850 = vsel %vm849, %v842, %v848
    %vm851 = vcmp.eq.f32.partialorder %v161, %v784
    %v852 = vsel %vm851, 8, 9
    %vm853 = vcmp.lt.s32.totalorder %v846, %v852
    %v854 = vsel %vm853, %v846, %v852
    %vm855 = vcmp.eq.s32.totalorder %v850, 0
    %v856 = vsel %vm855, 1, 0
    %v857 = vcvt.s32.f32 %v856
    %v858 = vrot.slane %v857, 4
    %v859 = vadd.f32 %v857, %v858
    %v860 = vrot.slane %v859, 2
    %v861 = vadd.f32 %v859, %v860
    %v862 = vrot.slane %v861, 1
    %v863 = vadd.f32 %v861, %v862
    %vm864 = vcmp.eq.s32.totalorder %v854, 0
    %v865 = vsel %vm864, 1, 0
    %v866 = vcvt.s32.f32 %v865
    %v867 = vrot.slane %v866, 4
    %v868 = vadd.f32 %v866, %v867
    %v869 = vrot.slane %v868, 2
    %v870 = vadd.f32 %v868, %v869
    %v871 = vrot.slane %v870, 1
    %v872 = vadd.f32 %v870, %v871
    %v873 = vsub.f32 %v872, %v863
    %v874 = vand.u32 2147483647, %v873
    %v875 = vmul.f32 %v874, 2.0
    %v876 = vadd.f32 %v875, 0.0
    %vm877 = vcmp.eq.s32.totalorder %v850, 1
    %v878 = vsel %vm877, 1, 0
    %v879 = vcvt.s32.f32 %v878
    %v880 = vrot.slane %v879, 4
    %v881 = vadd.f32 %v879, %v880
    %v882 = vrot.slane %v881, 2
    %v883 = vadd.f32 %v881, %v882
    %v884 = vrot.slane %v883, 1
    %v885 = vadd.f32 %v883, %v884
    %vm886 = vcmp.eq.s32.totalorder %v854, 1
    %v887 = vsel %vm886, 1, 0
    %v888 = vcvt.s32.f32 %v887
    %v889 = vrot.slane %v888, 4
    %v890 = vadd.f32 %v888, %v889
    %v891 = vrot.slane %v890, 2
    %v892 = vadd.f32 %v890, %v891
    %v893 = vrot.slane %v892, 1
    %v894 = vadd.f32 %v892, %v893
    %v895 = vsub.f32 %v894, %v885
    %v896 = vand.u32 2147483647, %v895
    %v897 = vadd.f32 %v876, %v896
    %vm898 = vcmp.eq.s32.totalorder %v850, 2
    %v899 = vsel %vm898, 1, 0
    %v900 = vcvt.s32.f32 %v899
    %v901 = vrot.slane %v900, 4
    %v902 = vadd.f32 %v900, %v901
    %v903 = vrot.slane %v902, 2
    %v904 = vadd.f32 %v902, %v903
    %v905 = vrot.slane %v904, 1
    %v906 = vadd.f32 %v904, %v905
    %vm907 = vcmp.eq.s32.totalorder %v854, 2
    %v908 = vsel %vm907, 1, 0
    %v909 = vcvt.s32.f32 %v908
    %v910 = vrot.slane %v909, 4
    %v911 = vadd.f32 %v909, %v910
    %v912 = vrot.slane %v911, 2
    %v913 = vadd.f32 %v911, %v912
    %v914 = vrot.slane %v913, 1
    %v915 = vadd.f32 %v913, %v914
    %v916 = vsub.f32 %v915, %v906
    %v917 = vand.u32 2147483647, %v916
    %v918 = vadd.f32 %v897, %v917
    %vm919 = vcmp.eq.s32.totalorder %v850, 3
    %v920 = vsel %vm919, 1, 0
    %v921 = vcvt.s32.f32 %v920
    %v922 = vrot.slane %v921, 4
    %v923 = vadd.f32 %v921, %v922
    %v924 = vrot.slane %v923, 2
    %v925 = vadd.f32 %v923, %v924
    %v926 = vrot.slane %v925, 1
    %v927 = vadd.f32 %v925, %v926
    %vm928 = vcmp.eq.s32.totalorder %v854, 3
    %v929 = vsel %vm928, 1, 0
    %v930 = vcvt.s32.f32 %v929
    %v931 = vrot.slane %v930, 4
    %v932 = vadd.f32 %v930, %v931
    %v933 = vrot.slane %v932, 2
    %v934 = vadd.f32 %v932, %v933
    %v935 = vrot.slane %v934, 1
    %v936 = vadd.f32 %v934, %v935
    %v937 = vsub.f32 %v936, %v927
    %v938 = vand.u32 2147483647, %v937
    %v939 = vadd.f32 %v918, %v938
    %vm940 = vcmp.eq.s32.totalorder %v850, 4
    %v941 = vsel %vm940, 1, 0
    %v942 = vcvt.s32.f32 %v941
    %v943 = vrot.slane %v942, 4
    %v944 = vadd.f32 %v942, %v943
    %v945 = vrot.slane %v944, 2
    %v946 = vadd.f32 %v944, %v945
    %v947 = vrot.slane %v946, 1
    %v948 = vadd.f32 %v946, %v947
    %vm949 = vcmp.eq.s32.totalorder %v854, 4
    %v950 = vsel %vm949, 1, 0
    %v951 = vcvt.s32.f32 %v950
    %v952 = vrot.slane %v951, 4
    %v953 = vadd.f32 %v951, %v952
    %v954 = vrot.slane %v953, 2
    %v955 = vadd.f32 %v953, %v954
    %v956 = vrot.slane %v955, 1
    %v957 = vadd.f32 %v955, %v956
    %v958 = vsub.f32 %v957, %v948
    %v959 = vand.u32 2147483647, %v958
    %v960 = vadd.f32 %v939, %v959
    %vm961 = vcmp.eq.s32.totalorder %v850, 5
    %v962 = vsel %vm961, 1, 0
    %v963 = vcvt.s32.f32 %v962
    %v964 = vrot.slane %v963, 4
    %v965 = vadd.f32 %v963, %v964
    %v966 = vrot.slane %v965, 2
    %v967 = vadd.f32 %v965, %v966
    %v968 = vrot.slane %v967, 1
    %v969 = vadd.f32 %v967, %v968
    %vm970 = vcmp.eq.s32.totalorder %v854, 5
    %v971 = vsel %vm970, 1, 0
    %v972 = vcvt.s32.f32 %v971
    %v973 = vrot.slane %v972, 4
    %v974 = vadd.f32 %v972, %v973
    %v975 = vrot.slane %v974, 2
    %v976 = vadd.f32 %v974, %v975
    %v977 = vrot.slane %v976, 1
    %v978 = vadd.f32 %v976, %v977
    %v979 = vsub.f32 %v978, %v969
    %v980 = vand.u32 2147483647, %v979
    %v981 = vadd.f32 %v960, %v980
    %vm982 = vcmp.eq.s32.totalorder %v850, 6
    %v983 = vsel %vm982, 1, 0
    %v984 = vcvt.s32.f32 %v983
    %v985 = vrot.slane %v984, 4
    %v986 = vadd.f32 %v984, %v985
    %v987 = vrot.slane %v986, 2
    %v988 = vadd.f32 %v986, %v987
    %v989 = vrot.slane %v988, 1
    %v990 = vadd.f32 %v988, %v989
    %vm991 = vcmp.eq.s32.totalorder %v854, 6
    %v992 = vsel %vm991, 1, 0
    %v993 = vcvt.s32.f32 %v992
    %v994 = vrot.slane %v993, 4
    %v995 = vadd.f32 %v993, %v994
    %v996 = vrot.slane %v995, 2
    %v997 = vadd.f32 %v995, %v996
    %v998 = vrot.slane %v997, 1
    %v999 = vadd.f32 %v997, %v998
    %v1000 = vsub.f32 %v999, %v990
    %v1001 = vand.u32 2147483647, %v1000
    %v1002 = vadd.f32 %v981, %v1001
    %vm1003 = vcmp.eq.s32.totalorder %v850, 7
    %v1004 = vsel %vm1003, 1, 0
    %v1005 = vcvt.s32.f32 %v1004
    %v1006 = vrot.slane %v1005, 4
    %v1007 = vadd.f32 %v1005, %v1006
    %v1008 = vrot.slane %v1007, 2
    %v1009 = vadd.f32 %v1007, %v1008
    %v1010 = vrot.slane %v1009, 1
    %v1011 = vadd.f32 %v1009, %v1010
    %vm1012 = vcmp.eq.s32.totalorder %v854, 7
    %v1013 = vsel %vm1012, 1, 0
    %v1014 = vcvt.s32.f32 %v1013
    %v1015 = vrot.slane %v1014, 4
    %v1016 = vadd.f32 %v1014, %v1015
    %v1017 = vrot.slane %v1016, 2
    %v1018 = vadd.f32 %v1016, %v1017
    %v1019 = vrot.slane %v1018, 1
    %v1020 = vadd.f32 %v1018, %v1019
    %v1021 = vsub.f32 %v1020, %v1011
    %v1022 = vand.u32 2147483647, %v1021
    %v1023 = vadd.f32 %v1002, %v1022
    %vm1024 = vcmp.eq.s32.totalorder %v850, 8
    %v1025 = vsel %vm1024, 1, 0
    %v1026 = vcvt.s32.f32 %v1025
    %v1027 = vrot.slane %v1026, 4
    %v1028 = vadd.f32 %v1026, %v1027
    %v1029 = vrot.slane %v1028, 2
    %v1030 = vadd.f32 %v1028, %v1029
    %v1031 = vrot.slane %v1030, 1
    %v1032 = vadd.f32 %v1030, %v1031
    %vm1033 = vcmp.eq.s32.totalorder %v854, 8
    %v1034 = vsel %vm1033, 1, 0
    %v1035 = vcvt.s32.f32 %v1034
    %v1036 = vrot.slane %v1035, 4
    %v1037 = vadd.f32 %v1035, %v1036
    %v1038 = vrot.slane %v1037, 2
    %v1039 = vadd.f32 %v1037, %v1038
    %v1040 = vrot.slane %v1039, 1
    %v1041 = vadd.f32 %v1039, %v1040
    %v1042 = vsub.f32 %v1041, %v1032
    %v1043 = vand.u32 2147483647, %v1042
    %v1044 = vmul.f32 %v1043, 100.0
    %v1045 = vadd.f32 %v1023, %v1044
    %v1046 = vadd.f32 %v684, %v726
    %v1047 = vmul.f32 %v1045, 0.01
    %v1048 = vadd.f32 %v1046, %v1047
    %v1049 = vmul.f32 %v1048, 0.9
    %v1050 = vmul.f32 %v768, 0.1
    %v1051 = vadd.f32 %v1049, %v1050
    %1052 = vst [vmem:[#allocation13] sm:$0x1] %v1051
    // Predicated region
    $region50: #{tpu_custom_call.1} parent=1 // pred_check
      _
    $region51: #{tpu_custom_call.1} parent=1 // pred_check_branch
      %1054 = sbr.rel (0) target = $region53
    $region52: #{tpu_custom_call.1} parent=1 // pred_region
      %1056 = vsyncadd [#allocation4], 0
      %s1058 = sshll.u32 [#allocation13], 4
      %s1059 = int_to_ptr.vmem [resolvable:$true] %s1058
      %s1060 = sshll.u32 %s6, 4
      %s1061 = int_to_ptr.hbm [resolvable:$true] %s1060
      %1063 = dma.vmem_to_hbm [thread:$0]  %s1059, 16, %s1061, [#allocation4]
    $region53: #{tpu_custom_call.1} parent=1 // pred_fallthru
      _
    // Predicated region
    $region54: #{tpu_custom_call.1} parent=1 // pred_check
      _
    $region55: #{tpu_custom_call.1} parent=1 // pred_check_branch
      %1065 = sbr.rel (0) target = $region57
    $region56: #{tpu_custom_call.1} parent=1 // pred_region
      %1067 = dma.done [#allocation4], 16
    $region57: #{tpu_custom_call.1} parent=1 // pred_fallthru
      _
    %1068 = vsyncpa [#allocation3], 1
    %1069 = vsyncpa [#allocation6], 1
    %1070 = vsyncpa [#allocation9], 1
    %1071 = vsyncpa [#allocation12], 1
    %1072 = vsyncpa [#allocation4], 1

</llo_original>
